<compile_context>
chip_gen: v7x
topology: tpu7x:2x2x1
jax: 0.10.0
libtpu: 0.0.40
codegen_flags: <defaults>
</compile_context>

<pallas_src>
import jax
import jax.numpy as jnp
import numpy as np
from jax import lax
from jax.experimental import pallas as pl
from jax.experimental.pallas import tpu as pltpu


# ----------------------------------------------------------------------------
# Fused kernel: one grid step = one batch element; all L layers run in-kernel.
# ----------------------------------------------------------------------------
def _fused_kernel(q_ref,      # (L, 1, C)    pre-scaled queries (mu chain hoisted out)
                  x_ref,      # (1, C, HW)   spatial feature, channels-first
                  wkv_ref,    # (L, 2C, C)   fused key|value projection weights
                  bv_ref,     # (L, C, 1)    value bias (added to the (C,1) context)
                  gamma_ref,  # (L, C, HW)   LayerNorm weight slab
                  wc_ref,     # (L, C, C)    1x1 conv weight
                  cb_ref,     # (L, C, HW)   folded conv bias slab: wc @ beta + bc
                  out_ref):   # (1, C, HW)
    L, _, C = q_ref.shape
    HW = x_ref.shape[2]
    n = jnp.float32(C * HW)

    x = x_ref[0]                                            # (C, HW) f32

    # Fully-unrolled in-kernel layer loop (L static): static slices into the stacked
    # weight refs, no per-layer grid-step overhead.
    for l in range(L):
        # LayerNorm partial sums of x, issued up front so the XLU reductions overlap
        # with the MXU kv matmul (separate VLIW slots).
        rowsum_x = jnp.sum(x, axis=-1, keepdims=True)       # (C, 1)
        s1_x = jnp.sum(rowsum_x)                            # scalar
        s2_x = jnp.sum(x * x)                               # scalar

        # Fused key/value projection: one (2C, C) @ (C, HW) MXU push, lane dim = HW.
        # Key bias is dropped (softmax shift invariance); value bias folded below.
        kv = jnp.dot(wkv_ref[l], x, preferred_element_type=jnp.float32)   # (2C, HW)
        key = kv[:C]                                        # (C, HW)
        value = kv[C:]                                      # (C, HW)

        # Single-query attention; q is pre-scaled by 1/sqrt(C) in the wrapper.
        scores = jnp.dot(q_ref[l], key, preferred_element_type=jnp.float32)  # (1, HW)
        m = jnp.max(scores, axis=-1, keepdims=True)
        e = jnp.exp(scores - m)                             # (1, HW)
        inv_den = 1.0 / jnp.sum(e, axis=-1, keepdims=True)  # exact scalar divide
        # TODO(synk): Dropout(0.1) on attention weights omitted (eval-mode identity).

        # context (C,1): scale the tiny context instead of the (1,HW) weights;
        # bv * sum(attn) == bv since attention weights sum to 1.
        ctx = jnp.sum(value * e, axis=-1, keepdims=True) * inv_den + bv_ref[l]

        # Finish the LayerNorm stats algebraically (ctx is constant over HW per channel):
        #   sum(x+ctx)   = s1_x + HW*sum(ctx)
        #   sum((x+ctx)^2) = s2_x + 2*sum(ctx*rowsum_x) + HW*sum(ctx^2)
        sum_ctx = jnp.sum(ctx)
        sum_ctx2 = jnp.sum(ctx * ctx)
        cross = jnp.sum(ctx * rowsum_x)
        s1 = s1_x + jnp.float32(HW) * sum_ctx
        s2 = s2_x + 2.0 * cross + jnp.float32(HW) * sum_ctx2
        mean = s1 / n
        var = s2 / n - mean * mean
        inv_std = lax.rsqrt(var + 1e-5)

        # Normalize, apply gamma, 1x1 conv (== (C,C)@(C,HW) matmul) with the folded
        # lane-dense bias slab (wc @ beta + bc), then ReLU.
        z = ((x + ctx) - mean) * inv_std                    # (C, HW)
        y = jnp.dot(wc_ref[l], z * gamma_ref[l],
                    preferred_element_type=jnp.float32) + cb_ref[l]
        x = jnp.maximum(y, 0.0)

    out_ref[0] = x


# ----------------------------------------------------------------------------
# One-time weight packing (hoisted out of the jitted forward).
# ----------------------------------------------------------------------------
def pack_weights(layer_params, wu, bu, H, W):
    C = wu.shape[0]
    HW = H * W
    wq_t = jnp.stack([p["wq"].T for p in layer_params])                    # (L, C, C)
    bq = jnp.stack([p["bq"] for p in layer_params])                        # (L, C)
    wkv = jnp.stack([jnp.concatenate([p["wk"], p["wv"]], axis=0)
                     for p in layer_params])                               # (L, 2C, C)
    bv = jnp.stack([p["bv"].reshape(C, 1) for p in layer_params])          # (L, C, 1)
    gamma = jnp.stack([p["gamma"].reshape(C, HW) for p in layer_params])   # (L, C, HW)
    wc = jnp.stack([p["wc"] for p in layer_params])                        # (L, C, C)
    # Fold LayerNorm beta and conv bias into one lane-dense slab:
    #   wc @ (z*gamma + beta) + bc == wc @ (z*gamma) + (wc @ beta + bc)
    cb = jnp.stack([p["wc"] @ p["beta"].reshape(C, HW) + p["bc"].reshape(C, 1)
                    for p in layer_params])                                # (L, C, HW)
    return {"wq_t": wq_t, "bq": bq, "wkv": wkv, "bv": bv, "gamma": gamma,
            "wc": wc, "cb": cb, "wu_t": wu.T, "bu": bu}


# ----------------------------------------------------------------------------
# Jitted forward: tiny q-chain in XLA + one pallas_call.
# ----------------------------------------------------------------------------
def multi_layer_cross_attention(mu, spatial_feature, packed):
    """mu: (1, 1, C) ; spatial_feature: (B, C, H, W)  -> (B, C, H, W)."""
    B, C, H, W = spatial_feature.shape
    HW = H * W
    L = packed["wq_t"].shape[0]

    x = spatial_feature.reshape(B, C, HW).astype(jnp.float32)

    # Hoisted mu / query chain (x- and batch-independent); queries pre-scaled by 1/sqrt(C).
    scale = 1.0 / jnp.sqrt(jnp.float32(C))
    mu_l = mu.reshape(1, C).astype(jnp.float32)
    qs = []
    for l in range(L):
        qs.append((mu_l @ packed["wq_t"][l] + packed["bq"][l]) * scale)
        mu_l = jnp.maximum(mu_l @ packed["wu_t"] + packed["bu"], 0.0)
    q_all = jnp.stack(qs)                                                  # (L, 1, C)

    def shared(shape):
        return pl.BlockSpec(shape, lambda b: (0,) * len(shape))

    out = pl.pallas_call(
        _fused_kernel,
        out_shape=jax.ShapeDtypeStruct((B, C, HW), jnp.float32),
        grid=(B,),
        in_specs=[
            shared((L, 1, C)),                                 # q_all
            pl.BlockSpec((1, C, HW), lambda b: (b, 0, 0)),     # x (per-batch block)
            shared((L, 2 * C, C)),                             # wkv
            shared((L, C, 1)),                                 # bv
            shared((L, C, HW)),                                # gamma
            shared((L, C, C)),                                 # wc
            shared((L, C, HW)),                                # folded conv bias slab
        ],
        out_specs=pl.BlockSpec((1, C, HW), lambda b: (b, 0, 0)),
        compiler_params=pltpu.CompilerParams(
            dimension_semantics=("parallel",)),                # batch-per-TC on v7x
    )(q_all, x, packed["wkv"], packed["bv"], packed["gamma"],
      packed["wc"], packed["cb"])

    return out.reshape(B, C, H, W)


# ----------------------------------------------------------------------------
# Pure-JAX reference (mirrors the PyTorch module, eval mode) for verification.
# ----------------------------------------------------------------------------
def _reference_layer(mu, spat, p):
    B, C, H, W = spat.shape
    q = mu @ p["wq"].T + p["bq"]                                   # (1, 1, C)
    flat = spat.reshape(B, C, H * W)
    kv_in = jnp.transpose(flat, (0, 2, 1))                         # (B, HW, C)
    k = kv_in @ p["wk"].T + p["bk"]
    v = kv_in @ p["wv"].T + p["bv"]
    q = jnp.broadcast_to(q, (B, 1, C))
    scores = jnp.einsum("blc,bkc->blk", q, k) / jnp.sqrt(jnp.float32(C))
    w = jax.nn.softmax(scores, axis=-1)
    ctx = jnp.einsum("blk,bkc->blc", w, v)                         # (B, 1, C)
    combined = spat + ctx.reshape(B, C, 1, 1)
    mean = combined.mean(axis=(1, 2, 3), keepdims=True)
    var = ((combined - mean) ** 2).mean(axis=(1, 2, 3), keepdims=True)
    normed = (combined - mean) / jnp.sqrt(var + 1e-5)
    normed = normed * p["gamma"][None] + p["beta"][None]
    out = jnp.einsum("oc,bchw->bohw", p["wc"], normed) + p["bc"][None, :, None, None]
    return jnp.maximum(out, 0.0)


def _reference_forward(mu, spatial_feature, layer_params, wu, bu):
    x = spatial_feature
    for p in layer_params:
        x = _reference_layer(mu, x, p)
        mu = jnp.maximum(mu @ wu.T + bu, 0.0)
    return x


# ----------------------------------------------------------------------------
# Deterministic parameter init (PyTorch-default-style uniform bounds).
# ----------------------------------------------------------------------------
def _init_params(key, num_layers, C, H, W):
    bound = 1.0 / np.sqrt(C)

    def u(k, shape):
        return jax.random.uniform(k, shape, jnp.float32, -bound, bound)

    layer_params = []
    for _ in range(num_layers):
        keys = jax.random.split(key, 9)
        key = keys[0]
        p = {
            "wq": u(keys[1], (C, C)), "bq": u(keys[2], (C,)),
            "wk": u(keys[3], (C, C)), "bk": u(keys[4], (C,)),
            "wv": u(keys[5], (C, C)), "bv": u(keys[6], (C,)),
            "gamma": jnp.ones((C, H, W), jnp.float32),
            "beta": jnp.zeros((C, H, W), jnp.float32),
            "wc": u(keys[7], (C, C)), "bc": u(keys[8], (C,)),
        }
        layer_params.append(p)

    ku = jax.random.split(key, 3)
    wu = u(ku[1], (C, C))
    bu = u(ku[2], (C,))
    return layer_params, wu, bu


if __name__ == "__main__":
    num_layers = 2
    B, C, H, W = 2, 32, 16, 16   # batch, feature_dim, spatial_dim, spatial_dim

    root = jax.random.PRNGKey(0)
    k_mu, k_sp, k_par = jax.random.split(root, 3)

    mu = jax.random.normal(k_mu, (1, 1, C), jnp.float32)
    spatial_feature = jax.random.normal(k_sp, (B, C, H, W), jnp.float32)
    layer_params, wu, bu = _init_params(k_par, num_layers, C, H, W)

    # One-time weight packing (outside the jitted forward / hot loop).
    packed = jax.tree_util.tree_map(jax.block_until_ready,
                                    pack_weights(layer_params, wu, bu, H, W))

    fwd = jax.jit(multi_layer_cross_attention)
    out = jax.block_until_ready(fwd(mu, spatial_feature, packed))

    ref = jax.block_until_ready(
        _reference_forward(mu, spatial_feature, layer_params, wu, bu))

    assert out.shape == (B, C, H, W)
    # Exact softmax divide now; remaining differences are matmul-association /
    # bias-folding rounding only.
    np.testing.assert_allclose(np.asarray(out), np.asarray(ref), rtol=1e-3, atol=1e-3)

    print("KERNEL_OK")
</pallas_src>

<mosaic_0001>
module attributes {stable_mosaic.version = 11 : i64} {
  func.func @_fused_kernel(%arg0: i32, %arg1: memref<2x1x32xf32, #tpu.memory_space<vmem>>, %arg2: memref<1x32x256xf32, #tpu.memory_space<vmem>>, %arg3: memref<2x64x32xf32, #tpu.memory_space<vmem>>, %arg4: memref<2x32x1xf32, #tpu.memory_space<vmem>>, %arg5: memref<2x32x256xf32, #tpu.memory_space<vmem>>, %arg6: memref<2x32x32xf32, #tpu.memory_space<vmem>>, %arg7: memref<2x32x256xf32, #tpu.memory_space<vmem>>, %arg8: memref<1x32x256xf32, #tpu.memory_space<vmem>>) attributes {dimension_semantics = [#tpu.dimension_semantics<parallel>], iteration_bounds = array<i64: 2>, scalar_prefetch = 0 : i64, scratch_operands = 0 : i64, tpu.core_type = #tpu.core_type<tc>, window_params = [{pipeline_mode = #tpu.pipeline_mode<synchronous>, transform_indices = @transform_0, window_bounds = array<i64: 2, 1, 32>}, {transform_indices = @transform_1, window_bounds = array<i64: 1, 32, 256>}, {pipeline_mode = #tpu.pipeline_mode<synchronous>, transform_indices = @transform_2, window_bounds = array<i64: 2, 64, 32>}, {pipeline_mode = #tpu.pipeline_mode<synchronous>, transform_indices = @transform_3, window_bounds = array<i64: 2, 32, 1>}, {pipeline_mode = #tpu.pipeline_mode<synchronous>, transform_indices = @transform_4, window_bounds = array<i64: 2, 32, 256>}, {pipeline_mode = #tpu.pipeline_mode<synchronous>, transform_indices = @transform_5, window_bounds = array<i64: 2, 32, 32>}, {pipeline_mode = #tpu.pipeline_mode<synchronous>, transform_indices = @transform_6, window_bounds = array<i64: 2, 32, 256>}, {transform_indices = @transform_7, window_bounds = array<i64: 1, 32, 256>}]} {
    %c0 = arith.constant 0 : index
    %c0_0 = arith.constant 0 : index
    %c0_1 = arith.constant 0 : index
    %0 = vector.load %arg2[%c0, %c0_0, %c0_1] : memref<1x32x256xf32, #tpu.memory_space<vmem>>, vector<1x32x256xf32>
    %1 = vector.shape_cast %0 : vector<1x32x256xf32> to vector<32x256xf32>
    %cst = arith.constant dense<0.000000e+00> : vector<32xf32>
    %2 = vector.multi_reduction <add>, %1, %cst [1] : vector<32x256xf32> to vector<32xf32>
    %3 = vector.shape_cast %2 : vector<32xf32> to vector<32x1xf32>
    %4 = vector.shape_cast %3 : vector<32x1xf32> to vector<1x32x1xf32>
    %cst_2 = arith.constant dense<0.000000e+00> : vector<1xf32>
    %5 = vector.multi_reduction <add>, %4, %cst_2 [1, 2] : vector<1x32x1xf32> to vector<1xf32>
    %6 = vector.shape_cast %5 : vector<1xf32> to vector<1x1x1xf32>
    %7 = vector.extract %6[0, 0, 0] : f32 from vector<1x1x1xf32>
    %8 = arith.mulf %1, %1 : vector<32x256xf32>
    %9 = vector.shape_cast %8 : vector<32x256xf32> to vector<1x32x256xf32>
    %cst_3 = arith.constant dense<0.000000e+00> : vector<1xf32>
    %10 = vector.multi_reduction <add>, %9, %cst_3 [1, 2] : vector<1x32x256xf32> to vector<1xf32>
    %11 = vector.shape_cast %10 : vector<1xf32> to vector<1x1x1xf32>
    %12 = vector.extract %11[0, 0, 0] : f32 from vector<1x1x1xf32>
    %c0_4 = arith.constant 0 : index
    %c0_5 = arith.constant 0 : index
    %c0_6 = arith.constant 0 : index
    %13 = vector.load %arg3[%c0_4, %c0_5, %c0_6] : memref<2x64x32xf32, #tpu.memory_space<vmem>>, vector<1x64x32xf32>
    %14 = vector.shape_cast %13 : vector<1x64x32xf32> to vector<64x32xf32>
    %cst_7 = arith.constant dense<0.000000e+00> : vector<64x256xf32>
    %15 = tpu.matmul %14, %1, %cst_7 {dimension_numbers = #tpu.dot_dimension_numbers<[1], [0], [0], [1], [0, 0, 1, 1], [], []>} : vector<64x32xf32>, vector<32x256xf32>, vector<64x256xf32> -> vector<64x256xf32>
    %16 = vector.extract_strided_slice %15 {offsets = [0, 0], sizes = [32, 256], strides = [1, 1]} : vector<64x256xf32> to vector<32x256xf32>
    %17 = vector.extract_strided_slice %15 {offsets = [32, 0], sizes = [32, 256], strides = [1, 1]} : vector<64x256xf32> to vector<32x256xf32>
    %c0_8 = arith.constant 0 : index
    %c0_9 = arith.constant 0 : index
    %c0_10 = arith.constant 0 : index
    %18 = vector.load %arg1[%c0_8, %c0_9, %c0_10] : memref<2x1x32xf32, #tpu.memory_space<vmem>>, vector<1x1x32xf32>
    %19 = vector.shape_cast %18 : vector<1x1x32xf32> to vector<1x32xf32>
    %cst_11 = arith.constant dense<0.000000e+00> : vector<1x256xf32>
    %20 = tpu.matmul %19, %16, %cst_11 {dimension_numbers = #tpu.dot_dimension_numbers<[1], [0], [0], [1], [0, 0, 1, 1], [], []>} : vector<1x32xf32>, vector<32x256xf32>, vector<1x256xf32> -> vector<1x256xf32>
    %cst_12 = arith.constant dense<0xFF800000> : vector<1xf32>
    %21 = vector.multi_reduction <maximumf>, %20, %cst_12 [1] : vector<1x256xf32> to vector<1xf32>
    %22 = vector.shape_cast %21 : vector<1xf32> to vector<1x1xf32>
    %23 = vector.broadcast %22 : vector<1x1xf32> to vector<1x256xf32>
    %24 = arith.subf %20, %23 : vector<1x256xf32>
    %25 = math.exp %24 : vector<1x256xf32>
    %cst_13 = arith.constant dense<0.000000e+00> : vector<1xf32>
    %26 = vector.multi_reduction <add>, %25, %cst_13 [1] : vector<1x256xf32> to vector<1xf32>
    %27 = vector.shape_cast %26 : vector<1xf32> to vector<1x1xf32>
    %cst_14 = arith.constant 1.000000e+00 : f32
    %28 = vector.broadcast %cst_14 : f32 to vector<1x1xf32>
    %29 = arith.divf %28, %27 : vector<1x1xf32>
    %30 = vector.broadcast %25 : vector<1x256xf32> to vector<32x256xf32>
    %31 = arith.mulf %17, %30 : vector<32x256xf32>
    %cst_15 = arith.constant dense<0.000000e+00> : vector<32xf32>
    %32 = vector.multi_reduction <add>, %31, %cst_15 [1] : vector<32x256xf32> to vector<32xf32>
    %33 = vector.shape_cast %32 : vector<32xf32> to vector<32x1xf32>
    %34 = vector.broadcast %29 : vector<1x1xf32> to vector<32x1xf32>
    %35 = arith.mulf %33, %34 : vector<32x1xf32>
    %c0_16 = arith.constant 0 : index
    %c0_17 = arith.constant 0 : index
    %c0_18 = arith.constant 0 : index
    %36 = vector.load %arg4[%c0_16, %c0_17, %c0_18] : memref<2x32x1xf32, #tpu.memory_space<vmem>>, vector<1x32x1xf32>
    %37 = vector.shape_cast %36 : vector<1x32x1xf32> to vector<32x1xf32>
    %38 = arith.addf %35, %37 : vector<32x1xf32>
    %39 = vector.shape_cast %38 : vector<32x1xf32> to vector<1x32x1xf32>
    %cst_19 = arith.constant dense<0.000000e+00> : vector<1xf32>
    %40 = vector.multi_reduction <add>, %39, %cst_19 [1, 2] : vector<1x32x1xf32> to vector<1xf32>
    %41 = vector.shape_cast %40 : vector<1xf32> to vector<1x1x1xf32>
    %42 = vector.extract %41[0, 0, 0] : f32 from vector<1x1x1xf32>
    %43 = arith.mulf %38, %38 : vector<32x1xf32>
    %44 = vector.shape_cast %43 : vector<32x1xf32> to vector<1x32x1xf32>
    %cst_20 = arith.constant dense<0.000000e+00> : vector<1xf32>
    %45 = vector.multi_reduction <add>, %44, %cst_20 [1, 2] : vector<1x32x1xf32> to vector<1xf32>
    %46 = vector.shape_cast %45 : vector<1xf32> to vector<1x1x1xf32>
    %47 = vector.extract %46[0, 0, 0] : f32 from vector<1x1x1xf32>
    %48 = arith.mulf %38, %3 : vector<32x1xf32>
    %49 = vector.shape_cast %48 : vector<32x1xf32> to vector<1x32x1xf32>
    %cst_21 = arith.constant dense<0.000000e+00> : vector<1xf32>
    %50 = vector.multi_reduction <add>, %49, %cst_21 [1, 2] : vector<1x32x1xf32> to vector<1xf32>
    %51 = vector.shape_cast %50 : vector<1xf32> to vector<1x1x1xf32>
    %52 = vector.extract %51[0, 0, 0] : f32 from vector<1x1x1xf32>
    %cst_22 = arith.constant 2.560000e+02 : f32
    %53 = arith.mulf %cst_22, %42 : f32
    %54 = arith.addf %7, %53 : f32
    %cst_23 = arith.constant 2.000000e+00 : f32
    %55 = arith.mulf %cst_23, %52 : f32
    %56 = arith.addf %12, %55 : f32
    %cst_24 = arith.constant 2.560000e+02 : f32
    %57 = arith.mulf %cst_24, %47 : f32
    %58 = arith.addf %56, %57 : f32
    %cst_25 = arith.constant 8.192000e+03 : f32
    %59 = arith.divf %54, %cst_25 : f32
    %cst_26 = arith.constant 8.192000e+03 : f32
    %60 = arith.divf %58, %cst_26 : f32
    %61 = arith.mulf %59, %59 : f32
    %62 = arith.subf %60, %61 : f32
    %cst_27 = arith.constant 9.99999974E-6 : f32
    %63 = arith.addf %62, %cst_27 : f32
    %64 = math.rsqrt %63 : f32
    %65 = vector.broadcast %38 : vector<32x1xf32> to vector<32x256xf32>
    %66 = arith.addf %1, %65 : vector<32x256xf32>
    %67 = vector.broadcast %59 : f32 to vector<32x256xf32>
    %68 = arith.subf %66, %67 : vector<32x256xf32>
    %69 = vector.broadcast %64 : f32 to vector<32x256xf32>
    %70 = arith.mulf %68, %69 : vector<32x256xf32>
    %c0_28 = arith.constant 0 : index
    %c0_29 = arith.constant 0 : index
    %c0_30 = arith.constant 0 : index
    %71 = vector.load %arg6[%c0_28, %c0_29, %c0_30] : memref<2x32x32xf32, #tpu.memory_space<vmem>>, vector<1x32x32xf32>
    %72 = vector.shape_cast %71 : vector<1x32x32xf32> to vector<32x32xf32>
    %c0_31 = arith.constant 0 : index
    %c0_32 = arith.constant 0 : index
    %c0_33 = arith.constant 0 : index
    %73 = vector.load %arg5[%c0_31, %c0_32, %c0_33] : memref<2x32x256xf32, #tpu.memory_space<vmem>>, vector<1x32x256xf32>
    %74 = vector.shape_cast %73 : vector<1x32x256xf32> to vector<32x256xf32>
    %75 = arith.mulf %70, %74 : vector<32x256xf32>
    %cst_34 = arith.constant dense<0.000000e+00> : vector<32x256xf32>
    %76 = tpu.matmul %72, %75, %cst_34 {dimension_numbers = #tpu.dot_dimension_numbers<[1], [0], [0], [1], [0, 0, 1, 1], [], []>} : vector<32x32xf32>, vector<32x256xf32>, vector<32x256xf32> -> vector<32x256xf32>
    %c0_35 = arith.constant 0 : index
    %c0_36 = arith.constant 0 : index
    %c0_37 = arith.constant 0 : index
    %77 = vector.load %arg7[%c0_35, %c0_36, %c0_37] : memref<2x32x256xf32, #tpu.memory_space<vmem>>, vector<1x32x256xf32>
    %78 = vector.shape_cast %77 : vector<1x32x256xf32> to vector<32x256xf32>
    %79 = arith.addf %76, %78 : vector<32x256xf32>
    %cst_38 = arith.constant 0.000000e+00 : f32
    %80 = vector.broadcast %cst_38 : f32 to vector<32x256xf32>
    %81 = arith.maximumf %79, %80 : vector<32x256xf32>
    %cst_39 = arith.constant dense<0.000000e+00> : vector<32xf32>
    %82 = vector.multi_reduction <add>, %81, %cst_39 [1] : vector<32x256xf32> to vector<32xf32>
    %83 = vector.shape_cast %82 : vector<32xf32> to vector<32x1xf32>
    %84 = vector.shape_cast %83 : vector<32x1xf32> to vector<1x32x1xf32>
    %cst_40 = arith.constant dense<0.000000e+00> : vector<1xf32>
    %85 = vector.multi_reduction <add>, %84, %cst_40 [1, 2] : vector<1x32x1xf32> to vector<1xf32>
    %86 = vector.shape_cast %85 : vector<1xf32> to vector<1x1x1xf32>
    %87 = vector.extract %86[0, 0, 0] : f32 from vector<1x1x1xf32>
    %88 = arith.mulf %81, %81 : vector<32x256xf32>
    %89 = vector.shape_cast %88 : vector<32x256xf32> to vector<1x32x256xf32>
    %cst_41 = arith.constant dense<0.000000e+00> : vector<1xf32>
    %90 = vector.multi_reduction <add>, %89, %cst_41 [1, 2] : vector<1x32x256xf32> to vector<1xf32>
    %91 = vector.shape_cast %90 : vector<1xf32> to vector<1x1x1xf32>
    %92 = vector.extract %91[0, 0, 0] : f32 from vector<1x1x1xf32>
    %c1 = arith.constant 1 : index
    %c0_42 = arith.constant 0 : index
    %c0_43 = arith.constant 0 : index
    %93 = vector.load %arg3[%c1, %c0_42, %c0_43] : memref<2x64x32xf32, #tpu.memory_space<vmem>>, vector<1x64x32xf32>
    %94 = vector.shape_cast %93 : vector<1x64x32xf32> to vector<64x32xf32>
    %cst_44 = arith.constant dense<0.000000e+00> : vector<64x256xf32>
    %95 = tpu.matmul %94, %81, %cst_44 {dimension_numbers = #tpu.dot_dimension_numbers<[1], [0], [0], [1], [0, 0, 1, 1], [], []>} : vector<64x32xf32>, vector<32x256xf32>, vector<64x256xf32> -> vector<64x256xf32>
    %96 = vector.extract_strided_slice %95 {offsets = [0, 0], sizes = [32, 256], strides = [1, 1]} : vector<64x256xf32> to vector<32x256xf32>
    %97 = vector.extract_strided_slice %95 {offsets = [32, 0], sizes = [32, 256], strides = [1, 1]} : vector<64x256xf32> to vector<32x256xf32>
    %c1_45 = arith.constant 1 : index
    %c0_46 = arith.constant 0 : index
    %c0_47 = arith.constant 0 : index
    %98 = vector.load %arg1[%c1_45, %c0_46, %c0_47] : memref<2x1x32xf32, #tpu.memory_space<vmem>>, vector<1x1x32xf32>
    %99 = vector.shape_cast %98 : vector<1x1x32xf32> to vector<1x32xf32>
    %cst_48 = arith.constant dense<0.000000e+00> : vector<1x256xf32>
    %100 = tpu.matmul %99, %96, %cst_48 {dimension_numbers = #tpu.dot_dimension_numbers<[1], [0], [0], [1], [0, 0, 1, 1], [], []>} : vector<1x32xf32>, vector<32x256xf32>, vector<1x256xf32> -> vector<1x256xf32>
    %cst_49 = arith.constant dense<0xFF800000> : vector<1xf32>
    %101 = vector.multi_reduction <maximumf>, %100, %cst_49 [1] : vector<1x256xf32> to vector<1xf32>
    %102 = vector.shape_cast %101 : vector<1xf32> to vector<1x1xf32>
    %103 = vector.broadcast %102 : vector<1x1xf32> to vector<1x256xf32>
    %104 = arith.subf %100, %103 : vector<1x256xf32>
    %105 = math.exp %104 : vector<1x256xf32>
    %cst_50 = arith.constant dense<0.000000e+00> : vector<1xf32>
    %106 = vector.multi_reduction <add>, %105, %cst_50 [1] : vector<1x256xf32> to vector<1xf32>
    %107 = vector.shape_cast %106 : vector<1xf32> to vector<1x1xf32>
    %cst_51 = arith.constant 1.000000e+00 : f32
    %108 = vector.broadcast %cst_51 : f32 to vector<1x1xf32>
    %109 = arith.divf %108, %107 : vector<1x1xf32>
    %110 = vector.broadcast %105 : vector<1x256xf32> to vector<32x256xf32>
    %111 = arith.mulf %97, %110 : vector<32x256xf32>
    %cst_52 = arith.constant dense<0.000000e+00> : vector<32xf32>
    %112 = vector.multi_reduction <add>, %111, %cst_52 [1] : vector<32x256xf32> to vector<32xf32>
    %113 = vector.shape_cast %112 : vector<32xf32> to vector<32x1xf32>
    %114 = vector.broadcast %109 : vector<1x1xf32> to vector<32x1xf32>
    %115 = arith.mulf %113, %114 : vector<32x1xf32>
    %c1_53 = arith.constant 1 : index
    %c0_54 = arith.constant 0 : index
    %c0_55 = arith.constant 0 : index
    %116 = vector.load %arg4[%c1_53, %c0_54, %c0_55] : memref<2x32x1xf32, #tpu.memory_space<vmem>>, vector<1x32x1xf32>
    %117 = vector.shape_cast %116 : vector<1x32x1xf32> to vector<32x1xf32>
    %118 = arith.addf %115, %117 : vector<32x1xf32>
    %119 = vector.shape_cast %118 : vector<32x1xf32> to vector<1x32x1xf32>
    %cst_56 = arith.constant dense<0.000000e+00> : vector<1xf32>
    %120 = vector.multi_reduction <add>, %119, %cst_56 [1, 2] : vector<1x32x1xf32> to vector<1xf32>
    %121 = vector.shape_cast %120 : vector<1xf32> to vector<1x1x1xf32>
    %122 = vector.extract %121[0, 0, 0] : f32 from vector<1x1x1xf32>
    %123 = arith.mulf %118, %118 : vector<32x1xf32>
    %124 = vector.shape_cast %123 : vector<32x1xf32> to vector<1x32x1xf32>
    %cst_57 = arith.constant dense<0.000000e+00> : vector<1xf32>
    %125 = vector.multi_reduction <add>, %124, %cst_57 [1, 2] : vector<1x32x1xf32> to vector<1xf32>
    %126 = vector.shape_cast %125 : vector<1xf32> to vector<1x1x1xf32>
    %127 = vector.extract %126[0, 0, 0] : f32 from vector<1x1x1xf32>
    %128 = arith.mulf %118, %83 : vector<32x1xf32>
    %129 = vector.shape_cast %128 : vector<32x1xf32> to vector<1x32x1xf32>
    %cst_58 = arith.constant dense<0.000000e+00> : vector<1xf32>
    %130 = vector.multi_reduction <add>, %129, %cst_58 [1, 2] : vector<1x32x1xf32> to vector<1xf32>
    %131 = vector.shape_cast %130 : vector<1xf32> to vector<1x1x1xf32>
    %132 = vector.extract %131[0, 0, 0] : f32 from vector<1x1x1xf32>
    %cst_59 = arith.constant 2.560000e+02 : f32
    %133 = arith.mulf %cst_59, %122 : f32
    %134 = arith.addf %87, %133 : f32
    %cst_60 = arith.constant 2.000000e+00 : f32
    %135 = arith.mulf %cst_60, %132 : f32
    %136 = arith.addf %92, %135 : f32
    %cst_61 = arith.constant 2.560000e+02 : f32
    %137 = arith.mulf %cst_61, %127 : f32
    %138 = arith.addf %136, %137 : f32
    %cst_62 = arith.constant 8.192000e+03 : f32
    %139 = arith.divf %134, %cst_62 : f32
    %cst_63 = arith.constant 8.192000e+03 : f32
    %140 = arith.divf %138, %cst_63 : f32
    %141 = arith.mulf %139, %139 : f32
    %142 = arith.subf %140, %141 : f32
    %cst_64 = arith.constant 9.99999974E-6 : f32
    %143 = arith.addf %142, %cst_64 : f32
    %144 = math.rsqrt %143 : f32
    %145 = vector.broadcast %118 : vector<32x1xf32> to vector<32x256xf32>
    %146 = arith.addf %81, %145 : vector<32x256xf32>
    %147 = vector.broadcast %139 : f32 to vector<32x256xf32>
    %148 = arith.subf %146, %147 : vector<32x256xf32>
    %149 = vector.broadcast %144 : f32 to vector<32x256xf32>
    %150 = arith.mulf %148, %149 : vector<32x256xf32>
    %c1_65 = arith.constant 1 : index
    %c0_66 = arith.constant 0 : index
    %c0_67 = arith.constant 0 : index
    %151 = vector.load %arg6[%c1_65, %c0_66, %c0_67] : memref<2x32x32xf32, #tpu.memory_space<vmem>>, vector<1x32x32xf32>
    %152 = vector.shape_cast %151 : vector<1x32x32xf32> to vector<32x32xf32>
    %c1_68 = arith.constant 1 : index
    %c0_69 = arith.constant 0 : index
    %c0_70 = arith.constant 0 : index
    %153 = vector.load %arg5[%c1_68, %c0_69, %c0_70] : memref<2x32x256xf32, #tpu.memory_space<vmem>>, vector<1x32x256xf32>
    %154 = vector.shape_cast %153 : vector<1x32x256xf32> to vector<32x256xf32>
    %155 = arith.mulf %150, %154 : vector<32x256xf32>
    %cst_71 = arith.constant dense<0.000000e+00> : vector<32x256xf32>
    %156 = tpu.matmul %152, %155, %cst_71 {dimension_numbers = #tpu.dot_dimension_numbers<[1], [0], [0], [1], [0, 0, 1, 1], [], []>} : vector<32x32xf32>, vector<32x256xf32>, vector<32x256xf32> -> vector<32x256xf32>
    %c1_72 = arith.constant 1 : index
    %c0_73 = arith.constant 0 : index
    %c0_74 = arith.constant 0 : index
    %157 = vector.load %arg7[%c1_72, %c0_73, %c0_74] : memref<2x32x256xf32, #tpu.memory_space<vmem>>, vector<1x32x256xf32>
    %158 = vector.shape_cast %157 : vector<1x32x256xf32> to vector<32x256xf32>
    %159 = arith.addf %156, %158 : vector<32x256xf32>
    %cst_75 = arith.constant 0.000000e+00 : f32
    %160 = vector.broadcast %cst_75 : f32 to vector<32x256xf32>
    %161 = arith.maximumf %159, %160 : vector<32x256xf32>
    %c0_76 = arith.constant 0 : index
    %c0_77 = arith.constant 0 : index
    %c0_78 = arith.constant 0 : index
    %162 = vector.load %arg8[%c0_76, %c0_77, %c0_78] : memref<1x32x256xf32, #tpu.memory_space<vmem>>, vector<1x32x256xf32>
    %163 = vector.shape_cast %162 : vector<1x32x256xf32> to vector<32x256xf32>
    %164 = vector.shape_cast %161 : vector<32x256xf32> to vector<1x32x256xf32>
    tpu.vector_store %arg8[%c0_76, %c0_77, %c0_78], %164 {strides = array<i32>} : memref<1x32x256xf32, #tpu.memory_space<vmem>>, vector<1x32x256xf32>,
    return
  }
  func.func @transform_0(%arg0: i32) -> (i32, i32, i32) {
    %c0_i32 = arith.constant 0 : i32
    %c0_i32_0 = arith.constant 0 : i32
    %c0_i32_1 = arith.constant 0 : i32
    %c0_i32_2 = arith.constant 0 : i32
    return %c0_i32, %c0_i32_0, %c0_i32_1 : i32, i32, i32
  }
  func.func @transform_1(%arg0: i32) -> (i32, i32, i32) {
    %c0_i32 = arith.constant 0 : i32
    %c0_i32_0 = arith.constant 0 : i32
    %c0_i32_1 = arith.constant 0 : i32
    return %arg0, %c0_i32, %c0_i32_0 : i32, i32, i32
  }
  func.func @transform_2(%arg0: i32) -> (i32, i32, i32) {
    %c0_i32 = arith.constant 0 : i32
    %c0_i32_0 = arith.constant 0 : i32
    %c0_i32_1 = arith.constant 0 : i32
    %c0_i32_2 = arith.constant 0 : i32
    return %c0_i32, %c0_i32_0, %c0_i32_1 : i32, i32, i32
  }
  func.func @transform_3(%arg0: i32) -> (i32, i32, i32) {
    %c0_i32 = arith.constant 0 : i32
    %c0_i32_0 = arith.constant 0 : i32
    %c0_i32_1 = arith.constant 0 : i32
    %c0_i32_2 = arith.constant 0 : i32
    return %c0_i32, %c0_i32_0, %c0_i32_1 : i32, i32, i32
  }
  func.func @transform_4(%arg0: i32) -> (i32, i32, i32) {
    %c0_i32 = arith.constant 0 : i32
    %c0_i32_0 = arith.constant 0 : i32
    %c0_i32_1 = arith.constant 0 : i32
    %c0_i32_2 = arith.constant 0 : i32
    return %c0_i32, %c0_i32_0, %c0_i32_1 : i32, i32, i32
  }
  func.func @transform_5(%arg0: i32) -> (i32, i32, i32) {
    %c0_i32 = arith.constant 0 : i32
    %c0_i32_0 = arith.constant 0 : i32
    %c0_i32_1 = arith.constant 0 : i32
    %c0_i32_2 = arith.constant 0 : i32
    return %c0_i32, %c0_i32_0, %c0_i32_1 : i32, i32, i32
  }
  func.func @transform_6(%arg0: i32) -> (i32, i32, i32) {
    %c0_i32 = arith.constant 0 : i32
    %c0_i32_0 = arith.constant 0 : i32
    %c0_i32_1 = arith.constant 0 : i32
    %c0_i32_2 = arith.constant 0 : i32
    return %c0_i32, %c0_i32_0, %c0_i32_1 : i32, i32, i32
  }
  func.func @transform_7(%arg0: i32) -> (i32, i32, i32) {
    %c0_i32 = arith.constant 0 : i32
    %c0_i32_0 = arith.constant 0 : i32
    %c0_i32_1 = arith.constant 0 : i32
    return %arg0, %c0_i32, %c0_i32_0 : i32, i32, i32
  }
}

</mosaic_0001>

<llo_original>
// kernel: multi_layer_cross_attention.1
$region0: #{multi_layer_cross_attention.1}
  #allocation0 [shape = 'u32[]', space=smem, size = 0x4, offset = 0x4, fixed_abs, tag = 'smem constant byte address 0x4 - core index']
  #allocation1 [shape = 'u32[144,128]{1,0:T(1,128)}', space=vmem, size = 0x12000, scoped, tag = 'internal scratch']
  %s0 = inlined_call_operand.vmem [shape: f32[2,1,32], index: 0, kind: input, shape index: {}]
  %s1 = inlined_call_operand.vmem [shape: f32[2,32,256], index: 1, kind: input, shape index: {}]
  %s2 = inlined_call_operand.vmem [shape: f32[2,64,32], index: 2, kind: input, shape index: {}]
  %s3 = inlined_call_operand.vmem [shape: f32[2,32,1], index: 3, kind: input, shape index: {}]
  %s4 = inlined_call_operand.vmem [shape: f32[2,32,256], index: 4, kind: input, shape index: {}]
  %s5 = inlined_call_operand.vmem [shape: f32[2,32,32], index: 5, kind: input, shape index: {}]
  %s6 = inlined_call_operand.vmem [shape: f32[2,32,256], index: 6, kind: input, shape index: {}]
  %s7 = inlined_call_operand.vmem [shape: f32[2,32,256], index: 7, kind: output, shape index: {}]
  %s8 = sld [smem:[#allocation0]]
  $region61: #{multi_layer_cross_attention.1} parent=0
    _
  %s10 = ssub.s32 1, %s8
  %s11 = scalar_select 0, %s10, %s8
  loop: start=0, step=1, limit=4
  $region2: #{multi_layer_cross_attention.1} parent=0 // loop_pre_header
    _
  $region3: #{multi_layer_cross_attention.1} parent=0 // loop_header
    %s13 = sphi 0, %s17
    %p14 = scmp.ge.s32.totalorder %s13, 4
    %s21 = sphi 0, %s21
    %s23 = sphi 0, %s21
    %s24 = sphi 0, %s23
    %s38 = sphi 0, %s24
    %s44 = sphi 0, %s46
    %s47 = sphi 0, %s44
    %s48 = sphi 0, %s47
    %s64 = sphi 0, %s48
    %s68 = sphi 0, %s68
    %s70 = sphi 0, %s68
    %s71 = sphi 0, %s70
    %s85 = sphi 0, %s71
    %s89 = sphi 0, %s89
    %s91 = sphi 0, %s89
    %s92 = sphi 0, %s91
    %s106 = sphi 0, %s92
    %s110 = sphi 0, %s110
    %s112 = sphi 0, %s110
    %s113 = sphi 0, %s112
    %s127 = sphi 0, %s113
    %s131 = sphi 0, %s131
    %s133 = sphi 0, %s131
    %s134 = sphi 0, %s133
    %s148 = sphi 0, %s134
    %s152 = sphi 0, %s152
    %s154 = sphi 0, %s152
    %s155 = sphi 0, %s154
    %s169 = sphi 0, %s155
    %s175 = sphi 0, %s177
    %s178 = sphi 0, %s175
    %s179 = sphi 0, %s178
    %s195 = sphi 0, %s179
  $region4: #{multi_layer_cross_attention.1} parent=0 // loop_header_branch
    %16 = sbr.rel (%p14) target = $region8
  $region5: #{multi_layer_cross_attention.1} parent=0 // loop_body
    %s18 = ssub.s32 %s13, 1
    %s19 = ssub.s32 %s13, 2
    %s20 = sadd.s32 %s13, 1
    %s22 = sadd.s32 %s21, 1
    %p25 = scmp.eq.s32.totalorder %s13, 1
    %p26 = scmp.ne.s32.totalorder %s21, %s23
    %p27 = scmp.eq.s32.totalorder %s13, 0
    %p28 = por %p26, %p27
    %p29 = scmp.ne.s32.totalorder %s21, %s23
    %p30 = scmp.eq.s32.totalorder %s18, 1
    %p31 = por %p29, %p30
    %p32 = scmp.ne.s32.totalorder %s23, %s24
    %p33 = scmp.eq.s32.totalorder %s18, 0
    %p34 = por %p32, %p33
    %p35 = scmp.ne.s32.totalorder %s23, %s24
    %p36 = scmp.eq.s32.totalorder %s19, 1
    %p37 = por %p35, %p36
    %p39 = scmp.ne.s32.totalorder %s24, %s38
    %p40 = scmp.eq.s32.totalorder %s19, 0
    %p41 = por %p39, %p40
    %s42 = ssub.s32 %s13, %s20
    %p43 = scmp.eq.s32.totalorder %s42, 0
    %s45 = sadd.s32 %s44, 1
    %s46 = scalar_select %p43, %s44, %s45
    %p49 = pneg %p43
    %p50 = scmp.eq.s32.totalorder %s13, 1
    %p51 = por %p49, %p50
    %p52 = scmp.ne.s32.totalorder %s44, %s47
    %p53 = scmp.eq.s32.totalorder %s13, 0
    %p54 = por %p52, %p53
    %p55 = scmp.ne.s32.totalorder %s44, %s47
    %p56 = scmp.eq.s32.totalorder %s18, 1
    %p57 = por %p55, %p56
    %p58 = scmp.ne.s32.totalorder %s47, %s48
    %p59 = scmp.eq.s32.totalorder %s18, 0
    %p60 = por %p58, %p59
    %p61 = scmp.ne.s32.totalorder %s47, %s48
    %p62 = scmp.eq.s32.totalorder %s19, 1
    %p63 = por %p61, %p62
    %p65 = scmp.ne.s32.totalorder %s48, %s64
    %p66 = scmp.eq.s32.totalorder %s19, 0
    %p67 = por %p65, %p66
    %s69 = sadd.s32 %s68, 1
    %p72 = scmp.eq.s32.totalorder %s13, 1
    %p73 = scmp.ne.s32.totalorder %s68, %s70
    %p74 = scmp.eq.s32.totalorder %s13, 0
    %p75 = por %p73, %p74
    %p76 = scmp.ne.s32.totalorder %s68, %s70
    %p77 = scmp.eq.s32.totalorder %s18, 1
    %p78 = por %p76, %p77
    %p79 = scmp.ne.s32.totalorder %s70, %s71
    %p80 = scmp.eq.s32.totalorder %s18, 0
    %p81 = por %p79, %p80
    %p82 = scmp.ne.s32.totalorder %s70, %s71
    %p83 = scmp.eq.s32.totalorder %s19, 1
    %p84 = por %p82, %p83
    %p86 = scmp.ne.s32.totalorder %s71, %s85
    %p87 = scmp.eq.s32.totalorder %s19, 0
    %p88 = por %p86, %p87
    %s90 = sadd.s32 %s89, 1
    %p93 = scmp.eq.s32.totalorder %s13, 1
    %p94 = scmp.ne.s32.totalorder %s89, %s91
    %p95 = scmp.eq.s32.totalorder %s13, 0
    %p96 = por %p94, %p95
    %p97 = scmp.ne.s32.totalorder %s89, %s91
    %p98 = scmp.eq.s32.totalorder %s18, 1
    %p99 = por %p97, %p98
    %p100 = scmp.ne.s32.totalorder %s91, %s92
    %p101 = scmp.eq.s32.totalorder %s18, 0
    %p102 = por %p100, %p101
    %p103 = scmp.ne.s32.totalorder %s91, %s92
    %p104 = scmp.eq.s32.totalorder %s19, 1
    %p105 = por %p103, %p104
    %p107 = scmp.ne.s32.totalorder %s92, %s106
    %p108 = scmp.eq.s32.totalorder %s19, 0
    %p109 = por %p107, %p108
    %s111 = sadd.s32 %s110, 1
    %p114 = scmp.eq.s32.totalorder %s13, 1
    %p115 = scmp.ne.s32.totalorder %s110, %s112
    %p116 = scmp.eq.s32.totalorder %s13, 0
    %p117 = por %p115, %p116
    %p118 = scmp.ne.s32.totalorder %s110, %s112
    %p119 = scmp.eq.s32.totalorder %s18, 1
    %p120 = por %p118, %p119
    %p121 = scmp.ne.s32.totalorder %s112, %s113
    %p122 = scmp.eq.s32.totalorder %s18, 0
    %p123 = por %p121, %p122
    %p124 = scmp.ne.s32.totalorder %s112, %s113
    %p125 = scmp.eq.s32.totalorder %s19, 1
    %p126 = por %p124, %p125
    %p128 = scmp.ne.s32.totalorder %s113, %s127
    %p129 = scmp.eq.s32.totalorder %s19, 0
    %p130 = por %p128, %p129
    %s132 = sadd.s32 %s131, 1
    %p135 = scmp.eq.s32.totalorder %s13, 1
    %p136 = scmp.ne.s32.totalorder %s131, %s133
    %p137 = scmp.eq.s32.totalorder %s13, 0
    %p138 = por %p136, %p137
    %p139 = scmp.ne.s32.totalorder %s131, %s133
    %p140 = scmp.eq.s32.totalorder %s18, 1
    %p141 = por %p139, %p140
    %p142 = scmp.ne.s32.totalorder %s133, %s134
    %p143 = scmp.eq.s32.totalorder %s18, 0
    %p144 = por %p142, %p143
    %p145 = scmp.ne.s32.totalorder %s133, %s134
    %p146 = scmp.eq.s32.totalorder %s19, 1
    %p147 = por %p145, %p146
    %p149 = scmp.ne.s32.totalorder %s134, %s148
    %p150 = scmp.eq.s32.totalorder %s19, 0
    %p151 = por %p149, %p150
    %s153 = sadd.s32 %s152, 1
    %p156 = scmp.eq.s32.totalorder %s13, 1
    %p157 = scmp.ne.s32.totalorder %s152, %s154
    %p158 = scmp.eq.s32.totalorder %s13, 0
    %p159 = por %p157, %p158
    %p160 = scmp.ne.s32.totalorder %s152, %s154
    %p161 = scmp.eq.s32.totalorder %s18, 1
    %p162 = por %p160, %p161
    %p163 = scmp.ne.s32.totalorder %s154, %s155
    %p164 = scmp.eq.s32.totalorder %s18, 0
    %p165 = por %p163, %p164
    %p166 = scmp.ne.s32.totalorder %s154, %s155
    %p167 = scmp.eq.s32.totalorder %s19, 1
    %p168 = por %p166, %p167
    %p170 = scmp.ne.s32.totalorder %s155, %s169
    %p171 = scmp.eq.s32.totalorder %s19, 0
    %p172 = por %p170, %p171
    %s173 = ssub.s32 %s13, %s20
    %p174 = scmp.eq.s32.totalorder %s173, 0
    %s176 = sadd.s32 %s175, 1
    %s177 = scalar_select %p174, %s175, %s176
    %p180 = pneg %p174
    %p181 = scmp.eq.s32.totalorder %s13, 1
    %p182 = por %p180, %p181
    %p183 = scmp.ne.s32.totalorder %s175, %s178
    %p184 = scmp.eq.s32.totalorder %s13, 0
    %p185 = por %p183, %p184
    %p186 = scmp.ne.s32.totalorder %s175, %s178
    %p187 = scmp.eq.s32.totalorder %s18, 1
    %p188 = por %p186, %p187
    %p189 = scmp.ne.s32.totalorder %s178, %s179
    %p190 = scmp.eq.s32.totalorder %s18, 0
    %p191 = por %p189, %p190
    %p192 = scmp.ne.s32.totalorder %s178, %s179
    %p193 = scmp.eq.s32.totalorder %s19, 1
    %p194 = por %p192, %p193
    %p196 = scmp.ne.s32.totalorder %s179, %s195
    %p197 = scmp.eq.s32.totalorder %s19, 0
    %p198 = por %p196, %p197
    %p199 = scmp.le.s32.totalorder 1, %s13
    %p200 = scmp.lt.s32.totalorder %s13, 3
    %p201 = pnand %p199, %p200
    %p202 = pneg %p201
    // Predicated region
    $region9: #{multi_layer_cross_attention.1} parent=5 // pred_check
      _
    $region10: #{multi_layer_cross_attention.1} parent=5 // pred_check_branch
      %204 = sbr.rel (%p201) target = $region12
    $region11: #{multi_layer_cross_attention.1} parent=5 // pred_region
      %s205 = ssub.s32 %s13, 1
      // Predicated region
      $region13: #{multi_layer_cross_attention.1} parent=11 // pred_check
        %p206 = pneg %p34
      $region14: #{multi_layer_cross_attention.1} parent=11 // pred_check_branch
        %208 = sbr.rel (%p206) target = $region16
      $region15: #{multi_layer_cross_attention.1} parent=11 // pred_region
        _
      $region16: #{multi_layer_cross_attention.1} parent=11 // pred_fallthru
        _
      // Predicated region
      $region17: #{multi_layer_cross_attention.1} parent=11 // pred_check
        %p209 = pneg %p81
      $region18: #{multi_layer_cross_attention.1} parent=11 // pred_check_branch
        %211 = sbr.rel (%p209) target = $region20
      $region19: #{multi_layer_cross_attention.1} parent=11 // pred_region
        _
      $region20: #{multi_layer_cross_attention.1} parent=11 // pred_fallthru
        _
      // Predicated region
      $region21: #{multi_layer_cross_attention.1} parent=11 // pred_check
        %p212 = pneg %p102
      $region22: #{multi_layer_cross_attention.1} parent=11 // pred_check_branch
        %214 = sbr.rel (%p212) target = $region24
      $region23: #{multi_layer_cross_attention.1} parent=11 // pred_region
        _
      $region24: #{multi_layer_cross_attention.1} parent=11 // pred_fallthru
        _
      // Predicated region
      $region25: #{multi_layer_cross_attention.1} parent=11 // pred_check
        %p215 = pneg %p123
      $region26: #{multi_layer_cross_attention.1} parent=11 // pred_check_branch
        %217 = sbr.rel (%p215) target = $region28
      $region27: #{multi_layer_cross_attention.1} parent=11 // pred_region
        _
      $region28: #{multi_layer_cross_attention.1} parent=11 // pred_fallthru
        _
      // Predicated region
      $region29: #{multi_layer_cross_attention.1} parent=11 // pred_check
        %p218 = pneg %p144
      $region30: #{multi_layer_cross_attention.1} parent=11 // pred_check_branch
        %220 = sbr.rel (%p218) target = $region32
      $region31: #{multi_layer_cross_attention.1} parent=11 // pred_region
        _
      $region32: #{multi_layer_cross_attention.1} parent=11 // pred_fallthru
        _
      // Predicated region
      $region33: #{multi_layer_cross_attention.1} parent=11 // pred_check
        %p221 = pneg %p165
      $region34: #{multi_layer_cross_attention.1} parent=11 // pred_check_branch
        %223 = sbr.rel (%p221) target = $region36
      $region35: #{multi_layer_cross_attention.1} parent=11 // pred_region
        _
      $region36: #{multi_layer_cross_attention.1} parent=11 // pred_fallthru
        _
    $region12: #{multi_layer_cross_attention.1} parent=5 // pred_fallthru
      _
    %p224 = scmp.lt.s32.totalorder %s13, 2
    // Predicated region
    $region37: #{multi_layer_cross_attention.1} parent=5 // pred_check
      %p225 = pneg %p224
    $region38: #{multi_layer_cross_attention.1} parent=5 // pred_check_branch
      %227 = sbr.rel (%p225) target = $region40
    $region39: #{multi_layer_cross_attention.1} parent=5 // pred_region
      // Predicated region
      $region41: #{multi_layer_cross_attention.1} parent=39 // pred_check
        %p228 = pneg %p54
      $region42: #{multi_layer_cross_attention.1} parent=39 // pred_check_branch
        %230 = sbr.rel (%p228) target = $region44
      $region43: #{multi_layer_cross_attention.1} parent=39 // pred_region
        %p231 = scmp.lt.s32.totalorder %s13, 1
        %s232 = scalar_select %p231, %s13, 1
        %s233 = smul.addr %s232, 8
        %s234 = smul.addr %s233, 8
        %s235 = scalar_lea.vmem %s1, %s234
      $region44: #{multi_layer_cross_attention.1} parent=39 // pred_fallthru
        _
    $region40: #{multi_layer_cross_attention.1} parent=5 // pred_fallthru
      _
    %p236 = scmp.le.s32.totalorder 1, %s13
    %p237 = scmp.lt.s32.totalorder %s13, 3
    %p238 = pnand %p236, %p237
    %p239 = pneg %p238
    // Predicated region
    $region45: #{multi_layer_cross_attention.1} parent=5 // pred_check
      _
    $region46: #{multi_layer_cross_attention.1} parent=5 // pred_check_branch
      %241 = sbr.rel (%p238) target = $region48
    $region47: #{multi_layer_cross_attention.1} parent=5 // pred_region
      %s242 = ssub.s32 %s13, 1
      %p243 = pneg %p34
      %p244 = pneg %p31
      %p245 = scmp.lt.s32.totalorder %s18, 1
      %s246 = scalar_select %p245, %s18, 1
      %s247 = smul.addr %s246, 8
      %s248 = smul.addr %s247, 8
      %s249 = scalar_lea.vmem %s1, %s248
      %p250 = pneg %p60
      %p251 = pneg %p57
      %p252 = pneg %p81
      %p253 = pneg %p78
      %p254 = pneg %p102
      %p255 = pneg %p99
      %p256 = pneg %p123
      %p257 = pneg %p120
      %p258 = pneg %p144
      %p259 = pneg %p141
      %p260 = pneg %p165
      %p261 = pneg %p162
      %p262 = pneg %p191
      %p263 = pneg %p188
      %p264 = scmp.lt.s32.totalorder %s18, 1
      %s265 = scalar_select %p264, %s18, 1
      %s266 = smul.addr %s265, 8
      %s267 = smul.addr %s266, 8
      %s268 = scalar_lea.vmem %s7, %s267
      %p269 = scmp.lt.s32.totalorder %s18, 1
      %s270 = scalar_select %p269, %s18, 1
      %s271 = smul.addr %s270, 8
      %s272 = smul.addr %s271, 8
      %s273 = scalar_lea.vmem %s1, %s272
      %p274 = scmp.lt.s32.totalorder %s18, 1
      %s275 = scalar_select %p274, %s18, 1
      %s276 = smul.addr %s275, 8
      %s277 = smul.addr %s276, 8
      %s278 = scalar_lea.vmem %s7, %s277
      %v279 = vld [vmem:[%s273] sm:$0xff]
      %v280 = vld [vmem:[%s273 + $0x8] sm:$0xff]
      %v281 = vld [vmem:[%s273 + $0x10] sm:$0xff]
      %v282 = vld [vmem:[%s273 + $0x18] sm:$0xff]
      %v283 = vld [vmem:[%s273 + $0x20] sm:$0xff]
      %v284 = vld [vmem:[%s273 + $0x28] sm:$0xff]
      %v285 = vld [vmem:[%s273 + $0x30] sm:$0xff]
      %v286 = vld [vmem:[%s273 + $0x38] sm:$0xff]
      %v287 = vadd.f32 %v279, %v280
      %288 = vadd.xlane.f32.xlu0 %v287
      %v289 = vpop.xlane.xlu0 %288
      %v290 = vadd.f32 %v281, %v282
      %291 = vadd.xlane.f32.xlu0 %v290
      %v292 = vpop.xlane.xlu0 %291
      %v293 = vadd.f32 %v283, %v284
      %294 = vadd.xlane.f32.xlu0 %v293
      %v295 = vpop.xlane.xlu0 %294
      %v296 = vadd.f32 %v285, %v286
      %297 = vadd.xlane.f32.xlu0 %v296
      %v298 = vpop.xlane.xlu0 %297
      %vm299 = vcmask 7168
      %v300 = vsel %vm299, %v289, 0.0
      %v301 = vsel %vm299, %v292, 0.0
      %v302 = vadd.f32 %v300, %v301
      %v303 = vsel %vm299, %v295, 0.0
      %v304 = vadd.f32 %v302, %v303
      %v305 = vsel %vm299, %v298, 0.0
      %v306 = vadd.f32 %v304, %v305
      %307 = vadd.xlane.f32.xlu0 %v306
      %v308 = vpop.xlane.xlu0 %307
      %v309 = vrot.slane %v308, 4
      %v310 = vadd.f32 %v308, %v309
      %v311 = vrot.slane %v310, 2
      %v312 = vadd.f32 %v310, %v311
      %v313 = vrot.slane %v312, 1
      %v314 = vadd.f32 %v312, %v313
      %s315 = vtos %v314
      %v316 = vmul.f32 %v279, %v279
      %v317 = vmul.f32 %v280, %v280
      %v318 = vmul.f32 %v281, %v281
      %v319 = vmul.f32 %v282, %v282
      %v320 = vmul.f32 %v283, %v283
      %v321 = vmul.f32 %v284, %v284
      %v322 = vmul.f32 %v285, %v285
      %v323 = vmul.f32 %v286, %v286
      %v324 = vadd.f32 %v316, %v317
      %v325 = vadd.f32 %v324, %v318
      %v326 = vadd.f32 %v325, %v319
      %v327 = vadd.f32 %v326, %v320
      %v328 = vadd.f32 %v327, %v321
      %v329 = vadd.f32 %v328, %v322
      %v330 = vadd.f32 %v329, %v323
      %331 = vadd.xlane.f32.xlu0 %v330
      %v332 = vpop.xlane.xlu0 %331
      %v333 = vrot.slane %v332, 4
      %v334 = vadd.f32 %v332, %v333
      %v335 = vrot.slane %v334, 2
      %v336 = vadd.f32 %v334, %v335
      %v337 = vrot.slane %v336, 1
      %v338 = vadd.f32 %v336, %v337
      %s339 = vtos %v338
      %v340 = vld [vmem:[%s2] sm:$0xff]
      %v341 = vld [vmem:[%s2 + $0x8] sm:$0xff]
      %v342 = vld [vmem:[%s2 + $0x10] sm:$0xff]
      %v343 = vld [vmem:[%s2 + $0x18] sm:$0xff]
      %v344 = vld [vmem:[%s2 + $0x20] sm:$0xff]
      %v345 = vld [vmem:[%s2 + $0x28] sm:$0xff]
      %v346 = vld [vmem:[%s2 + $0x30] sm:$0xff]
      %v347 = vld [vmem:[%s2 + $0x38] sm:$0xff]
      %vm348 = vcmask 261120
      %v350 = vsel %vm348, %v340, 0
      %v353 = vsel %vm348, %v341, 0
      %v356 = vsel %vm348, %v342, 0
      %v359 = vsel %vm348, %v343, 0
      %v362 = vsel %vm348, %v344, 0
      %v365 = vsel %vm348, %v345, 0
      %v368 = vsel %vm348, %v346, 0
      %v371 = vsel %vm348, %v347, 0
      %373 = vmatprep.subr.mxu0 %v280
      %374 = vmatpush1.msra.mxu0 %v279
      %375 = vmatprep.subr.mxu0 %v282
      %376 = vmatpush1.msra.mxu0 %v281
      %377 = vmatprep.subr.mxu0 %v284
      %378 = vmatpush1.msra.mxu0 %v283
      %379 = vmatprep.subr.mxu0 %v286
      %380 = vmatpush1.msra.mxu0 %v285
      %381 = vmatprep.subr.mxu0 0.0
      %382 = vmatpush1.msra.mxu0 0.0
      %383 = vmatprep.subr.mxu0 0.0
      %384 = vmatpush1.msra.mxu0 0.0
      %385 = vmatprep.subr.mxu0 0.0
      %386 = vmatpush1.msra.mxu0 0.0
      %387 = vmatprep.subr.mxu0 0.0
      %388 = vmatpush1.msra.mxu0 0.0
      %389 = vmatprep.subr.mxu0 0.0
      %390 = vmatpush1.msra.mxu0 0.0
      %391 = vmatprep.subr.mxu0 0.0
      %392 = vmatpush1.msra.mxu0 0.0
      %393 = vmatprep.subr.mxu0 0.0
      %394 = vmatpush1.msra.mxu0 0.0
      %395 = vmatprep.subr.mxu0 0.0
      %396 = vmatpush1.msra.mxu0 0.0
      %397 = vmatprep.subr.mxu0 0.0
      %398 = vmatpush1.msra.mxu0 0.0
      %399 = vmatprep.subr.mxu0 0.0
      %400 = vmatpush1.msra.mxu0 0.0
      %401 = vmatprep.subr.mxu0 0.0
      %402 = vmatpush1.msra.mxu0 0.0
      %403 = vmatprep.subr.mxu0 0.0
      %404 = vmatpush1.msra.mxu0 0.0
      %405 = vmatprep.subr.mxu0 0.0
      %406 = vmatpush1.msra.mxu0 0.0
      %407 = vmatprep.subr.mxu0 0.0
      %408 = vmatpush1.msra.mxu0 0.0
      %409 = vmatprep.subr.mxu0 0.0
      %410 = vmatpush1.msra.mxu0 0.0
      %411 = vmatprep.subr.mxu0 0.0
      %412 = vmatpush1.msra.mxu0 0.0
      %413 = vmatprep.subr.mxu0 0.0
      %414 = vmatpush1.msra.mxu0 0.0
      %415 = vmatprep.subr.mxu0 0.0
      %416 = vmatpush1.msra.mxu0 0.0
      %417 = vmatprep.subr.mxu0 0.0
      %418 = vmatpush1.msra.mxu0 0.0
      %419 = vmatprep.subr.mxu0 0.0
      %420 = vmatpush1.msra.mxu0 0.0
      %421 = vmatprep.subr.mxu0 0.0
      %422 = vmatpush1.msra.mxu0 0.0
      %423 = vmatprep.subr.mxu0 0.0
      %424 = vmatpush1.msra.mxu0 0.0
      %425 = vmatprep.subr.mxu0 0.0
      %426 = vmatpush1.msra.mxu0 0.0
      %427 = vmatprep.subr.mxu0 0.0
      %428 = vmatpush1.msra.mxu0 0.0
      %429 = vmatprep.subr.mxu0 0.0
      %430 = vmatpush1.msra.mxu0 0.0
      %431 = vmatprep.subr.mxu0 0.0
      %432 = vmatpush1.msra.mxu0 0.0
      %433 = vmatprep.subr.mxu0 0.0
      %434 = vmatpush1.msra.mxu0 0.0
      %435 = vmatprep.subr.mxu0 0.0
      %436 = vmatpush1.msra.mxu0 0.0
      %437 = vmatprep.mubr.f32.mxu0 0.0
      %438 = vmatmul.mubr.f32.gmra.mrb[0].mxu0 %v350
      %v439 = vpop.f32.mrb[0].mxu0
      %v440 = vadd.f32 0.0, %v439
      %v441 = vpop.f32.mrb[0].mxu0
      %v442 = vadd.f32 0.0, %v441
      %443 = vmatprep.mubr.f32.mxu0 0.0
      %444 = vmatmul.mubr.f32.gmra.mrb[0].mxu0 %v353
      %v445 = vpop.f32.mrb[0].mxu0
      %v446 = vadd.f32 0.0, %v445
      %v447 = vpop.f32.mrb[0].mxu0
      %v448 = vadd.f32 0.0, %v447
      %449 = vmatprep.mubr.f32.mxu0 0.0
      %450 = vmatmul.mubr.f32.gmra.mrb[0].mxu0 %v356
      %v451 = vpop.f32.mrb[0].mxu0
      %v452 = vadd.f32 0.0, %v451
      %v453 = vpop.f32.mrb[0].mxu0
      %v454 = vadd.f32 0.0, %v453
      %455 = vmatprep.mubr.f32.mxu0 0.0
      %456 = vmatmul.mubr.f32.gmra.mrb[0].mxu0 %v359
      %v457 = vpop.f32.mrb[0].mxu0
      %v458 = vadd.f32 0.0, %v457
      %v459 = vpop.f32.mrb[0].mxu0
      %v460 = vadd.f32 0.0, %v459
      %461 = vmatprep.mubr.f32.mxu0 0.0
      %462 = vmatmul.mubr.f32.gmra.mrb[0].mxu0 %v362
      %v463 = vpop.f32.mrb[0].mxu0
      %v464 = vadd.f32 0.0, %v463
      %v465 = vpop.f32.mrb[0].mxu0
      %v466 = vadd.f32 0.0, %v465
      %467 = vmatprep.mubr.f32.mxu0 0.0
      %468 = vmatmul.mubr.f32.gmra.mrb[0].mxu0 %v365
      %v469 = vpop.f32.mrb[0].mxu0
      %v470 = vadd.f32 0.0, %v469
      %v471 = vpop.f32.mrb[0].mxu0
      %v472 = vadd.f32 0.0, %v471
      %473 = vmatprep.mubr.f32.mxu0 0.0
      %474 = vmatmul.mubr.f32.gmra.mrb[0].mxu0 %v368
      %v475 = vpop.f32.mrb[0].mxu0
      %v476 = vadd.f32 0.0, %v475
      %v477 = vpop.f32.mrb[0].mxu0
      %v478 = vadd.f32 0.0, %v477
      %479 = vmatprep.mubr.f32.mxu0 0.0
      %480 = vmatmul.mubr.f32.gmra.mrb[0].mxu0 %v371
      %v481 = vpop.f32.mrb[0].mxu0
      %v482 = vadd.f32 0.0, %v481
      %v483 = vpop.f32.mrb[0].mxu0
      %v484 = vadd.f32 0.0, %v483
      %485 = vdwg.mxu0
      %v486 = vld [vmem:[%s0] sm:$0x1]
      %v488 = vsel %vm348, %v486, 0
      %490 = vmatprep.subr.mxu0 %v442
      %491 = vmatpush1.msra.mxu0 %v440
      %492 = vmatprep.subr.mxu0 %v448
      %493 = vmatpush1.msra.mxu0 %v446
      %494 = vmatprep.subr.mxu0 %v454
      %495 = vmatpush1.msra.mxu0 %v452
      %496 = vmatprep.subr.mxu0 %v460
      %497 = vmatpush1.msra.mxu0 %v458
      %498 = vmatprep.subr.mxu0 0.0
      %499 = vmatpush1.msra.mxu0 0.0
      %500 = vmatprep.subr.mxu0 0.0
      %501 = vmatpush1.msra.mxu0 0.0
      %502 = vmatprep.subr.mxu0 0.0
      %503 = vmatpush1.msra.mxu0 0.0
      %504 = vmatprep.subr.mxu0 0.0
      %505 = vmatpush1.msra.mxu0 0.0
      %506 = vmatprep.subr.mxu0 0.0
      %507 = vmatpush1.msra.mxu0 0.0
      %508 = vmatprep.subr.mxu0 0.0
      %509 = vmatpush1.msra.mxu0 0.0
      %510 = vmatprep.subr.mxu0 0.0
      %511 = vmatpush1.msra.mxu0 0.0
      %512 = vmatprep.subr.mxu0 0.0
      %513 = vmatpush1.msra.mxu0 0.0
      %514 = vmatprep.subr.mxu0 0.0
      %515 = vmatpush1.msra.mxu0 0.0
      %516 = vmatprep.subr.mxu0 0.0
      %517 = vmatpush1.msra.mxu0 0.0
      %518 = vmatprep.subr.mxu0 0.0
      %519 = vmatpush1.msra.mxu0 0.0
      %520 = vmatprep.subr.mxu0 0.0
      %521 = vmatpush1.msra.mxu0 0.0
      %522 = vmatprep.subr.mxu0 0.0
      %523 = vmatpush1.msra.mxu0 0.0
      %524 = vmatprep.subr.mxu0 0.0
      %525 = vmatpush1.msra.mxu0 0.0
      %526 = vmatprep.subr.mxu0 0.0
      %527 = vmatpush1.msra.mxu0 0.0
      %528 = vmatprep.subr.mxu0 0.0
      %529 = vmatpush1.msra.mxu0 0.0
      %530 = vmatprep.subr.mxu0 0.0
      %531 = vmatpush1.msra.mxu0 0.0
      %532 = vmatprep.subr.mxu0 0.0
      %533 = vmatpush1.msra.mxu0 0.0
      %534 = vmatprep.subr.mxu0 0.0
      %535 = vmatpush1.msra.mxu0 0.0
      %536 = vmatprep.subr.mxu0 0.0
      %537 = vmatpush1.msra.mxu0 0.0
      %538 = vmatprep.subr.mxu0 0.0
      %539 = vmatpush1.msra.mxu0 0.0
      %540 = vmatprep.subr.mxu0 0.0
      %541 = vmatpush1.msra.mxu0 0.0
      %542 = vmatprep.subr.mxu0 0.0
      %543 = vmatpush1.msra.mxu0 0.0
      %544 = vmatprep.subr.mxu0 0.0
      %545 = vmatpush1.msra.mxu0 0.0
      %546 = vmatprep.subr.mxu0 0.0
      %547 = vmatpush1.msra.mxu0 0.0
      %548 = vmatprep.subr.mxu0 0.0
      %549 = vmatpush1.msra.mxu0 0.0
      %550 = vmatprep.subr.mxu0 0.0
      %551 = vmatpush1.msra.mxu0 0.0
      %552 = vmatprep.subr.mxu0 0.0
      %553 = vmatpush1.msra.mxu0 0.0
      %554 = vmatprep.mubr.f32.mxu0 0.0
      %555 = vmatmul.mubr.f32.gmra.mrb[0].mxu0 %v488
      %v556 = vpop.f32.mrb[0].mxu0
      %v557 = vadd.f32 0.0, %v556
      %v558 = vpop.f32.mrb[0].mxu0
      %v559 = vadd.f32 0.0, %v558
      %560 = vdwg.mxu0
      %vm561 = vcmask 1040384
      %v562 = vsel %vm561, %v557, -inf
      %v563 = vsel %vm561, %v559, -inf
      %v564 = vmax.f32 %v562, %v563
      %565 = vmax.xlane.f32.xlu0 %v564
      %v566 = vpop.xlane.xlu0 %565
      %v567 = vsub.f32 %v557, %v566
      %v568 = vsub.f32 %v559, %v566
      %v569 = vmul.f32 %v567, 1.442695
      %v570 = vpow.pop %v569
      %v571 = vmul.f32 %v568, 1.442695
      %v572 = vpow.pop %v571
      %v573 = vsel %vm561, %v570, 0.0
      %v574 = vsel %vm561, %v572, 0.0
      %v575 = vadd.f32 %v573, %v574
      %576 = vadd.xlane.f32.xlu0 %v575
      %v577 = vpop.xlane.xlu0 %576
      %v578 = vrcp.pop %v577
      %v579 = vmul.f32 1.0, %v578
      %v580 = vlaneseq
      %v581 = vshrl.u32 %v580, 7
      %v582 = vsub.s32 0, %v581
      %v583 = vrot.slane %v570, %v582
      %v584 = vlaneseq
      %v585 = vshrl.u32 %v584, 7
      %v586 = vsub.s32 0, %v585
      %v587 = vrot.slane %v572, %v586
      %v588 = vmul.f32 %v464, %v583
      %v589 = vmul.f32 %v466, %v587
      %v590 = vmul.f32 %v470, %v583
      %v591 = vmul.f32 %v472, %v587
      %v592 = vmul.f32 %v476, %v583
      %v593 = vmul.f32 %v478, %v587
      %v594 = vmul.f32 %v482, %v583
      %v595 = vmul.f32 %v484, %v587
      %v596 = vadd.f32 %v588, %v589
      %597 = vadd.xlane.f32.xlu0 %v596
      %v598 = vpop.xlane.xlu0 %597
      %v599 = vadd.f32 %v590, %v591
      %600 = vadd.xlane.f32.xlu0 %v599
      %v601 = vpop.xlane.xlu0 %600
      %v602 = vadd.f32 %v592, %v593
      %603 = vadd.xlane.f32.xlu0 %v602
      %v604 = vpop.xlane.xlu0 %603
      %v605 = vadd.f32 %v594, %v595
      %606 = vadd.xlane.f32.xlu0 %v605
      %v607 = vpop.xlane.xlu0 %606
      %v608 = vlaneseq
      %v609 = vshrl.u32 %v608, 7
      %v610 = vsub.s32 0, %v609
      %v611 = vrot.slane %v579, %v610
      %v612 = vmul.f32 %v598, %v611
      %v613 = vmul.f32 %v601, %v611
      %v614 = vmul.f32 %v604, %v611
      %v615 = vmul.f32 %v607, %v611
      %v616 = vld [vmem:[%s3] sm:$0xff]
      %v617 = vld [vmem:[%s3 + $0x8] sm:$0xff]
      %v618 = vld [vmem:[%s3 + $0x10] sm:$0xff]
      %v619 = vld [vmem:[%s3 + $0x18] sm:$0xff]
      %v620 = vadd.f32 %v612, %v616
      %v621 = vadd.f32 %v613, %v617
      %v622 = vadd.f32 %v614, %v618
      %v623 = vadd.f32 %v615, %v619
      %v624 = vsel %vm299, %v620, 0.0
      %v625 = vsel %vm299, %v621, 0.0
      %v626 = vadd.f32 %v624, %v625
      %v627 = vsel %vm299, %v622, 0.0
      %v628 = vadd.f32 %v626, %v627
      %v629 = vsel %vm299, %v623, 0.0
      %v630 = vadd.f32 %v628, %v629
      %631 = vadd.xlane.f32.xlu0 %v630
      %v632 = vpop.xlane.xlu0 %631
      %v633 = vrot.slane %v632, 4
      %v634 = vadd.f32 %v632, %v633
      %v635 = vrot.slane %v634, 2
      %v636 = vadd.f32 %v634, %v635
      %v637 = vrot.slane %v636, 1
      %v638 = vadd.f32 %v636, %v637
      %s639 = vtos %v638
      %v640 = vmul.f32 %v620, %v620
      %v641 = vmul.f32 %v621, %v621
      %v642 = vmul.f32 %v622, %v622
      %v643 = vmul.f32 %v623, %v623
      %v644 = vsel %vm299, %v640, 0.0
      %v645 = vsel %vm299, %v641, 0.0
      %v646 = vadd.f32 %v644, %v645
      %v647 = vsel %vm299, %v642, 0.0
      %v648 = vadd.f32 %v646, %v647
      %v649 = vsel %vm299, %v643, 0.0
      %v650 = vadd.f32 %v648, %v649
      %651 = vadd.xlane.f32.xlu0 %v650
      %v652 = vpop.xlane.xlu0 %651
      %v653 = vrot.slane %v652, 4
      %v654 = vadd.f32 %v652, %v653
      %v655 = vrot.slane %v654, 2
      %v656 = vadd.f32 %v654, %v655
      %v657 = vrot.slane %v656, 1
      %v658 = vadd.f32 %v656, %v657
      %s659 = vtos %v658
      %v660 = vmul.f32 %v620, %v289
      %v661 = vmul.f32 %v621, %v292
      %v662 = vmul.f32 %v622, %v295
      %v663 = vmul.f32 %v623, %v298
      %v664 = vsel %vm299, %v660, 0.0
      %v665 = vsel %vm299, %v661, 0.0
      %v666 = vadd.f32 %v664, %v665
      %v667 = vsel %vm299, %v662, 0.0
      %v668 = vadd.f32 %v666, %v667
      %v669 = vsel %vm299, %v663, 0.0
      %v670 = vadd.f32 %v668, %v669
      %671 = vadd.xlane.f32.xlu0 %v670
      %v672 = vpop.xlane.xlu0 %671
      %v673 = vrot.slane %v672, 4
      %v674 = vadd.f32 %v672, %v673
      %v675 = vrot.slane %v674, 2
      %v676 = vadd.f32 %v674, %v675
      %v677 = vrot.slane %v676, 1
      %v678 = vadd.f32 %v676, %v677
      %s679 = vtos %v678
      %s680 = smul.f32 %s639, 256.0
      %s681 = sadd.f32 %s315, %s680
      %s682 = smul.f32 %s679, 2.0
      %s683 = sadd.f32 %s339, %s682
      %s684 = smul.f32 %s659, 256.0
      %s685 = sadd.f32 %s683, %s684
      %v686 = vrcp.pop 8192.0
      %s687 = vtos %v686
      %s688 = smul.f32 %s681, %s687
      %v689 = vrcp.pop 8192.0
      %s690 = vtos %v689
      %s691 = smul.f32 %s685, %s690
      %s692 = smul.f32 %s688, %s688
      %s693 = ssub.f32 %s691, %s692
      %s694 = sadd.f32 %s693, 1e-05
      %v695 = vstv %s694
      %v696 = vrsqrt.pop %v695
      %s697 = vtos %v696
      %699 = vset.pattern.permute.xlu0 0
      %700 = vperm.xlu0 %699, %v620
      %v701 = vpop.permute.xlu0 %700
      %704 = vset.pattern.permute.xlu0 0
      %705 = vperm.xlu0 %704, %v621
      %v706 = vpop.permute.xlu0 %705
      %709 = vset.pattern.permute.xlu0 0
      %710 = vperm.xlu0 %709, %v622
      %v711 = vpop.permute.xlu0 %710
      %714 = vset.pattern.permute.xlu0 0
      %715 = vperm.xlu0 %714, %v623
      %v716 = vpop.permute.xlu0 %715
      %v718 = vadd.f32 %v279, %v701
      %v719 = vadd.f32 %v280, %v701
      %v720 = vadd.f32 %v281, %v706
      %v721 = vadd.f32 %v282, %v706
      %v722 = vadd.f32 %v283, %v711
      %v723 = vadd.f32 %v284, %v711
      %v724 = vadd.f32 %v285, %v716
      %v725 = vadd.f32 %v286, %v716
      %v726 = vstv %s688
      %v727 = vsub.f32 %v718, %v726
      %v728 = vsub.f32 %v719, %v726
      %v729 = vsub.f32 %v720, %v726
      %v730 = vsub.f32 %v721, %v726
      %v731 = vsub.f32 %v722, %v726
      %v732 = vsub.f32 %v723, %v726
      %v733 = vsub.f32 %v724, %v726
      %v734 = vsub.f32 %v725, %v726
      %v735 = vstv %s697
      %v736 = vmul.f32 %v727, %v735
      %v737 = vmul.f32 %v728, %v735
      %v738 = vmul.f32 %v729, %v735
      %v739 = vmul.f32 %v730, %v735
      %v740 = vmul.f32 %v731, %v735
      %v741 = vmul.f32 %v732, %v735
      %v742 = vmul.f32 %v733, %v735
      %v743 = vmul.f32 %v734, %v735
      %v744 = vld [vmem:[%s5] sm:$0xff]
      %v745 = vld [vmem:[%s5 + $0x8] sm:$0xff]
      %v746 = vld [vmem:[%s5 + $0x10] sm:$0xff]
      %v747 = vld [vmem:[%s5 + $0x18] sm:$0xff]
      %v748 = vld [vmem:[%s4] sm:$0xff]
      %v749 = vld [vmem:[%s4 + $0x8] sm:$0xff]
      %v750 = vld [vmem:[%s4 + $0x10] sm:$0xff]
      %v751 = vld [vmem:[%s4 + $0x18] sm:$0xff]
      %v752 = vld [vmem:[%s4 + $0x20] sm:$0xff]
      %v753 = vld [vmem:[%s4 + $0x28] sm:$0xff]
      %v754 = vld [vmem:[%s4 + $0x30] sm:$0xff]
      %v755 = vld [vmem:[%s4 + $0x38] sm:$0xff]
      %v756 = vmul.f32 %v736, %v748
      %v757 = vmul.f32 %v737, %v749
      %v758 = vmul.f32 %v738, %v750
      %v759 = vmul.f32 %v739, %v751
      %v760 = vmul.f32 %v740, %v752
      %v761 = vmul.f32 %v741, %v753
      %v762 = vmul.f32 %v742, %v754
      %v763 = vmul.f32 %v743, %v755
      %v764 = vld [vmem:[%s6] sm:$0xff]
      %v765 = vld [vmem:[%s6 + $0x8] sm:$0xff]
      %v766 = vld [vmem:[%s6 + $0x10] sm:$0xff]
      %v767 = vld [vmem:[%s6 + $0x18] sm:$0xff]
      %v768 = vld [vmem:[%s6 + $0x20] sm:$0xff]
      %v769 = vld [vmem:[%s6 + $0x28] sm:$0xff]
      %v770 = vld [vmem:[%s6 + $0x30] sm:$0xff]
      %v771 = vld [vmem:[%s6 + $0x38] sm:$0xff]
      %v773 = vsel %vm348, %v744, 0
      %v776 = vsel %vm348, %v745, 0
      %v779 = vsel %vm348, %v746, 0
      %v782 = vsel %vm348, %v747, 0
      %784 = vmatprep.subr.mxu0 %v757
      %785 = vmatpush1.msra.mxu0 %v756
      %786 = vmatprep.subr.mxu0 %v759
      %787 = vmatpush1.msra.mxu0 %v758
      %788 = vmatprep.subr.mxu0 %v761
      %789 = vmatpush1.msra.mxu0 %v760
      %790 = vmatprep.subr.mxu0 %v763
      %791 = vmatpush1.msra.mxu0 %v762
      %792 = vmatprep.subr.mxu0 0.0
      %793 = vmatpush1.msra.mxu0 0.0
      %794 = vmatprep.subr.mxu0 0.0
      %795 = vmatpush1.msra.mxu0 0.0
      %796 = vmatprep.subr.mxu0 0.0
      %797 = vmatpush1.msra.mxu0 0.0
      %798 = vmatprep.subr.mxu0 0.0
      %799 = vmatpush1.msra.mxu0 0.0
      %800 = vmatprep.subr.mxu0 0.0
      %801 = vmatpush1.msra.mxu0 0.0
      %802 = vmatprep.subr.mxu0 0.0
      %803 = vmatpush1.msra.mxu0 0.0
      %804 = vmatprep.subr.mxu0 0.0
      %805 = vmatpush1.msra.mxu0 0.0
      %806 = vmatprep.subr.mxu0 0.0
      %807 = vmatpush1.msra.mxu0 0.0
      %808 = vmatprep.subr.mxu0 0.0
      %809 = vmatpush1.msra.mxu0 0.0
      %810 = vmatprep.subr.mxu0 0.0
      %811 = vmatpush1.msra.mxu0 0.0
      %812 = vmatprep.subr.mxu0 0.0
      %813 = vmatpush1.msra.mxu0 0.0
      %814 = vmatprep.subr.mxu0 0.0
      %815 = vmatpush1.msra.mxu0 0.0
      %816 = vmatprep.subr.mxu0 0.0
      %817 = vmatpush1.msra.mxu0 0.0
      %818 = vmatprep.subr.mxu0 0.0
      %819 = vmatpush1.msra.mxu0 0.0
      %820 = vmatprep.subr.mxu0 0.0
      %821 = vmatpush1.msra.mxu0 0.0
      %822 = vmatprep.subr.mxu0 0.0
      %823 = vmatpush1.msra.mxu0 0.0
      %824 = vmatprep.subr.mxu0 0.0
      %825 = vmatpush1.msra.mxu0 0.0
      %826 = vmatprep.subr.mxu0 0.0
      %827 = vmatpush1.msra.mxu0 0.0
      %828 = vmatprep.subr.mxu0 0.0
      %829 = vmatpush1.msra.mxu0 0.0
      %830 = vmatprep.subr.mxu0 0.0
      %831 = vmatpush1.msra.mxu0 0.0
      %832 = vmatprep.subr.mxu0 0.0
      %833 = vmatpush1.msra.mxu0 0.0
      %834 = vmatprep.subr.mxu0 0.0
      %835 = vmatpush1.msra.mxu0 0.0
      %836 = vmatprep.subr.mxu0 0.0
      %837 = vmatpush1.msra.mxu0 0.0
      %838 = vmatprep.subr.mxu0 0.0
      %839 = vmatpush1.msra.mxu0 0.0
      %840 = vmatprep.subr.mxu0 0.0
      %841 = vmatpush1.msra.mxu0 0.0
      %842 = vmatprep.subr.mxu0 0.0
      %843 = vmatpush1.msra.mxu0 0.0
      %844 = vmatprep.subr.mxu0 0.0
      %845 = vmatpush1.msra.mxu0 0.0
      %846 = vmatprep.subr.mxu0 0.0
      %847 = vmatpush1.msra.mxu0 0.0
      %848 = vmatprep.mubr.f32.mxu0 0.0
      %849 = vmatmul.mubr.f32.gmra.mrb[0].mxu0 %v773
      %v850 = vpop.f32.mrb[0].mxu0
      %v851 = vadd.f32 %v764, %v850
      %v852 = vpop.f32.mrb[0].mxu0
      %v853 = vadd.f32 %v765, %v852
      %854 = vmatprep.mubr.f32.mxu0 0.0
      %855 = vmatmul.mubr.f32.gmra.mrb[0].mxu0 %v776
      %v856 = vpop.f32.mrb[0].mxu0
      %v857 = vadd.f32 %v766, %v856
      %v858 = vpop.f32.mrb[0].mxu0
      %v859 = vadd.f32 %v767, %v858
      %860 = vmatprep.mubr.f32.mxu0 0.0
      %861 = vmatmul.mubr.f32.gmra.mrb[0].mxu0 %v779
      %v862 = vpop.f32.mrb[0].mxu0
      %v863 = vadd.f32 %v768, %v862
      %v864 = vpop.f32.mrb[0].mxu0
      %v865 = vadd.f32 %v769, %v864
      %866 = vmatprep.mubr.f32.mxu0 0.0
      %867 = vmatmul.mubr.f32.gmra.mrb[0].mxu0 %v782
      %v868 = vpop.f32.mrb[0].mxu0
      %v869 = vadd.f32 %v770, %v868
      %v870 = vpop.f32.mrb[0].mxu0
      %v871 = vadd.f32 %v771, %v870
      %872 = vdwg.mxu0
      %v873 = vmax.f32 %v851, 0.0
      %v874 = vmax.f32 %v853, 0.0
      %v875 = vmax.f32 %v857, 0.0
      %v876 = vmax.f32 %v859, 0.0
      %v877 = vmax.f32 %v863, 0.0
      %v878 = vmax.f32 %v865, 0.0
      %v879 = vmax.f32 %v869, 0.0
      %v880 = vmax.f32 %v871, 0.0
      %v881 = vadd.f32 %v873, %v874
      %882 = vadd.xlane.f32.xlu0 %v881
      %v883 = vpop.xlane.xlu0 %882
      %v884 = vadd.f32 %v875, %v876
      %885 = vadd.xlane.f32.xlu0 %v884
      %v886 = vpop.xlane.xlu0 %885
      %v887 = vadd.f32 %v877, %v878
      %888 = vadd.xlane.f32.xlu0 %v887
      %v889 = vpop.xlane.xlu0 %888
      %v890 = vadd.f32 %v879, %v880
      %891 = vadd.xlane.f32.xlu0 %v890
      %v892 = vpop.xlane.xlu0 %891
      %v893 = vsel %vm299, %v883, 0.0
      %v894 = vsel %vm299, %v886, 0.0
      %v895 = vadd.f32 %v893, %v894
      %v896 = vsel %vm299, %v889, 0.0
      %v897 = vadd.f32 %v895, %v896
      %v898 = vsel %vm299, %v892, 0.0
      %v899 = vadd.f32 %v897, %v898
      %900 = vadd.xlane.f32.xlu0 %v899
      %v901 = vpop.xlane.xlu0 %900
      %v902 = vrot.slane %v901, 4
      %v903 = vadd.f32 %v901, %v902
      %v904 = vrot.slane %v903, 2
      %v905 = vadd.f32 %v903, %v904
      %v906 = vrot.slane %v905, 1
      %v907 = vadd.f32 %v905, %v906
      %s908 = vtos %v907
      %v909 = vmul.f32 %v873, %v873
      %v910 = vmul.f32 %v874, %v874
      %v911 = vmul.f32 %v875, %v875
      %v912 = vmul.f32 %v876, %v876
      %v913 = vmul.f32 %v877, %v877
      %v914 = vmul.f32 %v878, %v878
      %v915 = vmul.f32 %v879, %v879
      %v916 = vmul.f32 %v880, %v880
      %v917 = vadd.f32 %v909, %v910
      %v918 = vadd.f32 %v917, %v911
      %v919 = vadd.f32 %v918, %v912
      %v920 = vadd.f32 %v919, %v913
      %v921 = vadd.f32 %v920, %v914
      %v922 = vadd.f32 %v921, %v915
      %v923 = vadd.f32 %v922, %v916
      %924 = vadd.xlane.f32.xlu0 %v923
      %v925 = vpop.xlane.xlu0 %924
      %v926 = vrot.slane %v925, 4
      %v927 = vadd.f32 %v925, %v926
      %v928 = vrot.slane %v927, 2
      %v929 = vadd.f32 %v927, %v928
      %v930 = vrot.slane %v929, 1
      %v931 = vadd.f32 %v929, %v930
      %s932 = vtos %v931
      %s933 = scalar_lea.vmem %s2, 64
      %v934 = vld [vmem:[%s933] sm:$0xff]
      %v935 = vld [vmem:[%s933 + $0x8] sm:$0xff]
      %v936 = vld [vmem:[%s933 + $0x10] sm:$0xff]
      %v937 = vld [vmem:[%s933 + $0x18] sm:$0xff]
      %v938 = vld [vmem:[%s933 + $0x20] sm:$0xff]
      %v939 = vld [vmem:[%s933 + $0x28] sm:$0xff]
      %v940 = vld [vmem:[%s933 + $0x30] sm:$0xff]
      %v941 = vld [vmem:[%s933 + $0x38] sm:$0xff]
      %v943 = vsel %vm348, %v934, 0
      %v946 = vsel %vm348, %v935, 0
      %v949 = vsel %vm348, %v936, 0
      %v952 = vsel %vm348, %v937, 0
      %v955 = vsel %vm348, %v938, 0
      %v958 = vsel %vm348, %v939, 0
      %v961 = vsel %vm348, %v940, 0
      %v964 = vsel %vm348, %v941, 0
      %966 = vmatprep.subr.mxu0 %v874
      %967 = vmatpush1.msra.mxu0 %v873
      %968 = vmatprep.subr.mxu0 %v876
      %969 = vmatpush1.msra.mxu0 %v875
      %970 = vmatprep.subr.mxu0 %v878
      %971 = vmatpush1.msra.mxu0 %v877
      %972 = vmatprep.subr.mxu0 %v880
      %973 = vmatpush1.msra.mxu0 %v879
      %974 = vmatprep.subr.mxu0 0.0
      %975 = vmatpush1.msra.mxu0 0.0
      %976 = vmatprep.subr.mxu0 0.0
      %977 = vmatpush1.msra.mxu0 0.0
      %978 = vmatprep.subr.mxu0 0.0
      %979 = vmatpush1.msra.mxu0 0.0
      %980 = vmatprep.subr.mxu0 0.0
      %981 = vmatpush1.msra.mxu0 0.0
      %982 = vmatprep.subr.mxu0 0.0
      %983 = vmatpush1.msra.mxu0 0.0
      %984 = vmatprep.subr.mxu0 0.0
      %985 = vmatpush1.msra.mxu0 0.0
      %986 = vmatprep.subr.mxu0 0.0
      %987 = vmatpush1.msra.mxu0 0.0
      %988 = vmatprep.subr.mxu0 0.0
      %989 = vmatpush1.msra.mxu0 0.0
      %990 = vmatprep.subr.mxu0 0.0
      %991 = vmatpush1.msra.mxu0 0.0
      %992 = vmatprep.subr.mxu0 0.0
      %993 = vmatpush1.msra.mxu0 0.0
      %994 = vmatprep.subr.mxu0 0.0
      %995 = vmatpush1.msra.mxu0 0.0
      %996 = vmatprep.subr.mxu0 0.0
      %997 = vmatpush1.msra.mxu0 0.0
      %998 = vmatprep.subr.mxu0 0.0
      %999 = vmatpush1.msra.mxu0 0.0
      %1000 = vmatprep.subr.mxu0 0.0
      %1001 = vmatpush1.msra.mxu0 0.0
      %1002 = vmatprep.subr.mxu0 0.0
      %1003 = vmatpush1.msra.mxu0 0.0
      %1004 = vmatprep.subr.mxu0 0.0
      %1005 = vmatpush1.msra.mxu0 0.0
      %1006 = vmatprep.subr.mxu0 0.0
      %1007 = vmatpush1.msra.mxu0 0.0
      %1008 = vmatprep.subr.mxu0 0.0
      %1009 = vmatpush1.msra.mxu0 0.0
      %1010 = vmatprep.subr.mxu0 0.0
      %1011 = vmatpush1.msra.mxu0 0.0
      %1012 = vmatprep.subr.mxu0 0.0
      %1013 = vmatpush1.msra.mxu0 0.0
      %1014 = vmatprep.subr.mxu0 0.0
      %1015 = vmatpush1.msra.mxu0 0.0
      %1016 = vmatprep.subr.mxu0 0.0
      %1017 = vmatpush1.msra.mxu0 0.0
      %1018 = vmatprep.subr.mxu0 0.0
      %1019 = vmatpush1.msra.mxu0 0.0
      %1020 = vmatprep.subr.mxu0 0.0
      %1021 = vmatpush1.msra.mxu0 0.0
      %1022 = vmatprep.subr.mxu0 0.0
      %1023 = vmatpush1.msra.mxu0 0.0
      %1024 = vmatprep.subr.mxu0 0.0
      %1025 = vmatpush1.msra.mxu0 0.0
      %1026 = vmatprep.subr.mxu0 0.0
      %1027 = vmatpush1.msra.mxu0 0.0
      %1028 = vmatprep.subr.mxu0 0.0
      %1029 = vmatpush1.msra.mxu0 0.0
      %1030 = vmatprep.mubr.f32.mxu0 0.0
      %1031 = vmatmul.mubr.f32.gmra.mrb[0].mxu0 %v943
      %v1032 = vpop.f32.mrb[0].mxu0
      %v1033 = vadd.f32 0.0, %v1032
      %v1034 = vpop.f32.mrb[0].mxu0
      %v1035 = vadd.f32 0.0, %v1034
      %1036 = vmatprep.mubr.f32.mxu0 0.0
      %1037 = vmatmul.mubr.f32.gmra.mrb[0].mxu0 %v946
      %v1038 = vpop.f32.mrb[0].mxu0
      %v1039 = vadd.f32 0.0, %v1038
      %v1040 = vpop.f32.mrb[0].mxu0
      %v1041 = vadd.f32 0.0, %v1040
      %1042 = vmatprep.mubr.f32.mxu0 0.0
      %1043 = vmatmul.mubr.f32.gmra.mrb[0].mxu0 %v949
      %v1044 = vpop.f32.mrb[0].mxu0
      %v1045 = vadd.f32 0.0, %v1044
      %v1046 = vpop.f32.mrb[0].mxu0
      %v1047 = vadd.f32 0.0, %v1046
      %1048 = vmatprep.mubr.f32.mxu0 0.0
      %1049 = vmatmul.mubr.f32.gmra.mrb[0].mxu0 %v952
      %v1050 = vpop.f32.mrb[0].mxu0
      %v1051 = vadd.f32 0.0, %v1050
      %v1052 = vpop.f32.mrb[0].mxu0
      %v1053 = vadd.f32 0.0, %v1052
      %1054 = vmatprep.mubr.f32.mxu0 0.0
      %1055 = vmatmul.mubr.f32.gmra.mrb[0].mxu0 %v955
      %v1056 = vpop.f32.mrb[0].mxu0
      %v1057 = vadd.f32 0.0, %v1056
      %v1058 = vpop.f32.mrb[0].mxu0
      %v1059 = vadd.f32 0.0, %v1058
      %1060 = vmatprep.mubr.f32.mxu0 0.0
      %1061 = vmatmul.mubr.f32.gmra.mrb[0].mxu0 %v958
      %v1062 = vpop.f32.mrb[0].mxu0
      %v1063 = vadd.f32 0.0, %v1062
      %v1064 = vpop.f32.mrb[0].mxu0
      %v1065 = vadd.f32 0.0, %v1064
      %1066 = vmatprep.mubr.f32.mxu0 0.0
      %1067 = vmatmul.mubr.f32.gmra.mrb[0].mxu0 %v961
      %v1068 = vpop.f32.mrb[0].mxu0
      %v1069 = vadd.f32 0.0, %v1068
      %v1070 = vpop.f32.mrb[0].mxu0
      %v1071 = vadd.f32 0.0, %v1070
      %1072 = vmatprep.mubr.f32.mxu0 0.0
      %1073 = vmatmul.mubr.f32.gmra.mrb[0].mxu0 %v964
      %v1074 = vpop.f32.mrb[0].mxu0
      %v1075 = vadd.f32 0.0, %v1074
      %v1076 = vpop.f32.mrb[0].mxu0
      %v1077 = vadd.f32 0.0, %v1076
      %1078 = vdwg.mxu0
      %s1079 = scalar_lea.vmem %s0, 1
      %v1080 = vld [vmem:[%s1079] sm:$0x1]
      %v1082 = vsel %vm348, %v1080, 0
      %1084 = vmatprep.subr.mxu0 %v1035
      %1085 = vmatpush1.msra.mxu0 %v1033
      %1086 = vmatprep.subr.mxu0 %v1041
      %1087 = vmatpush1.msra.mxu0 %v1039
      %1088 = vmatprep.subr.mxu0 %v1047
      %1089 = vmatpush1.msra.mxu0 %v1045
      %1090 = vmatprep.subr.mxu0 %v1053
      %1091 = vmatpush1.msra.mxu0 %v1051
      %1092 = vmatprep.subr.mxu0 0.0
      %1093 = vmatpush1.msra.mxu0 0.0
      %1094 = vmatprep.subr.mxu0 0.0
      %1095 = vmatpush1.msra.mxu0 0.0
      %1096 = vmatprep.subr.mxu0 0.0
      %1097 = vmatpush1.msra.mxu0 0.0
      %1098 = vmatprep.subr.mxu0 0.0
      %1099 = vmatpush1.msra.mxu0 0.0
      %1100 = vmatprep.subr.mxu0 0.0
      %1101 = vmatpush1.msra.mxu0 0.0
      %1102 = vmatprep.subr.mxu0 0.0
      %1103 = vmatpush1.msra.mxu0 0.0
      %1104 = vmatprep.subr.mxu0 0.0
      %1105 = vmatpush1.msra.mxu0 0.0
      %1106 = vmatprep.subr.mxu0 0.0
      %1107 = vmatpush1.msra.mxu0 0.0
      %1108 = vmatprep.subr.mxu0 0.0
      %1109 = vmatpush1.msra.mxu0 0.0
      %1110 = vmatprep.subr.mxu0 0.0
      %1111 = vmatpush1.msra.mxu0 0.0
      %1112 = vmatprep.subr.mxu0 0.0
      %1113 = vmatpush1.msra.mxu0 0.0
      %1114 = vmatprep.subr.mxu0 0.0
      %1115 = vmatpush1.msra.mxu0 0.0
      %1116 = vmatprep.subr.mxu0 0.0
      %1117 = vmatpush1.msra.mxu0 0.0
      %1118 = vmatprep.subr.mxu0 0.0
      %1119 = vmatpush1.msra.mxu0 0.0
      %1120 = vmatprep.subr.mxu0 0.0
      %1121 = vmatpush1.msra.mxu0 0.0
      %1122 = vmatprep.subr.mxu0 0.0
      %1123 = vmatpush1.msra.mxu0 0.0
      %1124 = vmatprep.subr.mxu0 0.0
      %1125 = vmatpush1.msra.mxu0 0.0
      %1126 = vmatprep.subr.mxu0 0.0
      %1127 = vmatpush1.msra.mxu0 0.0
      %1128 = vmatprep.subr.mxu0 0.0
      %1129 = vmatpush1.msra.mxu0 0.0
      %1130 = vmatprep.subr.mxu0 0.0
      %1131 = vmatpush1.msra.mxu0 0.0
      %1132 = vmatprep.subr.mxu0 0.0
      %1133 = vmatpush1.msra.mxu0 0.0
      %1134 = vmatprep.subr.mxu0 0.0
      %1135 = vmatpush1.msra.mxu0 0.0
      %1136 = vmatprep.subr.mxu0 0.0
      %1137 = vmatpush1.msra.mxu0 0.0
      %1138 = vmatprep.subr.mxu0 0.0
      %1139 = vmatpush1.msra.mxu0 0.0
      %1140 = vmatprep.subr.mxu0 0.0
      %1141 = vmatpush1.msra.mxu0 0.0
      %1142 = vmatprep.subr.mxu0 0.0
      %1143 = vmatpush1.msra.mxu0 0.0
      %1144 = vmatprep.subr.mxu0 0.0
      %1145 = vmatpush1.msra.mxu0 0.0
      %1146 = vmatprep.subr.mxu0 0.0
      %1147 = vmatpush1.msra.mxu0 0.0
      %1148 = vmatprep.mubr.f32.mxu0 0.0
      %1149 = vmatmul.mubr.f32.gmra.mrb[0].mxu0 %v1082
      %v1150 = vpop.f32.mrb[0].mxu0
      %v1151 = vadd.f32 0.0, %v1150
      %v1152 = vpop.f32.mrb[0].mxu0
      %v1153 = vadd.f32 0.0, %v1152
      %1154 = vdwg.mxu0
      %v1155 = vsel %vm561, %v1151, -inf
      %v1156 = vsel %vm561, %v1153, -inf
      %v1157 = vmax.f32 %v1155, %v1156
      %1158 = vmax.xlane.f32.xlu0 %v1157
      %v1159 = vpop.xlane.xlu0 %1158
      %v1160 = vsub.f32 %v1151, %v1159
      %v1161 = vsub.f32 %v1153, %v1159
      %v1162 = vmul.f32 %v1160, 1.442695
      %v1163 = vpow.pop %v1162
      %v1164 = vmul.f32 %v1161, 1.442695
      %v1165 = vpow.pop %v1164
      %v1166 = vsel %vm561, %v1163, 0.0
      %v1167 = vsel %vm561, %v1165, 0.0
      %v1168 = vadd.f32 %v1166, %v1167
      %1169 = vadd.xlane.f32.xlu0 %v1168
      %v1170 = vpop.xlane.xlu0 %1169
      %v1171 = vrcp.pop %v1170
      %v1172 = vmul.f32 1.0, %v1171
      %v1173 = vlaneseq
      %v1174 = vshrl.u32 %v1173, 7
      %v1175 = vsub.s32 0, %v1174
      %v1176 = vrot.slane %v1163, %v1175
      %v1177 = vlaneseq
      %v1178 = vshrl.u32 %v1177, 7
      %v1179 = vsub.s32 0, %v1178
      %v1180 = vrot.slane %v1165, %v1179
      %v1181 = vmul.f32 %v1057, %v1176
      %v1182 = vmul.f32 %v1059, %v1180
      %v1183 = vmul.f32 %v1063, %v1176
      %v1184 = vmul.f32 %v1065, %v1180
      %v1185 = vmul.f32 %v1069, %v1176
      %v1186 = vmul.f32 %v1071, %v1180
      %v1187 = vmul.f32 %v1075, %v1176
      %v1188 = vmul.f32 %v1077, %v1180
      %v1189 = vadd.f32 %v1181, %v1182
      %1190 = vadd.xlane.f32.xlu0 %v1189
      %v1191 = vpop.xlane.xlu0 %1190
      %v1192 = vadd.f32 %v1183, %v1184
      %1193 = vadd.xlane.f32.xlu0 %v1192
      %v1194 = vpop.xlane.xlu0 %1193
      %v1195 = vadd.f32 %v1185, %v1186
      %1196 = vadd.xlane.f32.xlu0 %v1195
      %v1197 = vpop.xlane.xlu0 %1196
      %v1198 = vadd.f32 %v1187, %v1188
      %1199 = vadd.xlane.f32.xlu0 %v1198
      %v1200 = vpop.xlane.xlu0 %1199
      %v1201 = vlaneseq
      %v1202 = vshrl.u32 %v1201, 7
      %v1203 = vsub.s32 0, %v1202
      %v1204 = vrot.slane %v1172, %v1203
      %v1205 = vmul.f32 %v1191, %v1204
      %v1206 = vmul.f32 %v1194, %v1204
      %v1207 = vmul.f32 %v1197, %v1204
      %v1208 = vmul.f32 %v1200, %v1204
      %s1209 = scalar_lea.vmem %s3, 32
      %v1210 = vld [vmem:[%s1209] sm:$0xff]
      %v1211 = vld [vmem:[%s1209 + $0x8] sm:$0xff]
      %v1212 = vld [vmem:[%s1209 + $0x10] sm:$0xff]
      %v1213 = vld [vmem:[%s1209 + $0x18] sm:$0xff]
      %v1214 = vadd.f32 %v1205, %v1210
      %v1215 = vadd.f32 %v1206, %v1211
      %v1216 = vadd.f32 %v1207, %v1212
      %v1217 = vadd.f32 %v1208, %v1213
      %v1218 = vsel %vm299, %v1214, 0.0
      %v1219 = vsel %vm299, %v1215, 0.0
      %v1220 = vadd.f32 %v1218, %v1219
      %v1221 = vsel %vm299, %v1216, 0.0
      %v1222 = vadd.f32 %v1220, %v1221
      %v1223 = vsel %vm299, %v1217, 0.0
      %v1224 = vadd.f32 %v1222, %v1223
      %1225 = vadd.xlane.f32.xlu0 %v1224
      %v1226 = vpop.xlane.xlu0 %1225
      %v1227 = vrot.slane %v1226, 4
      %v1228 = vadd.f32 %v1226, %v1227
      %v1229 = vrot.slane %v1228, 2
      %v1230 = vadd.f32 %v1228, %v1229
      %v1231 = vrot.slane %v1230, 1
      %v1232 = vadd.f32 %v1230, %v1231
      %s1233 = vtos %v1232
      %v1234 = vmul.f32 %v1214, %v1214
      %v1235 = vmul.f32 %v1215, %v1215
      %v1236 = vmul.f32 %v1216, %v1216
      %v1237 = vmul.f32 %v1217, %v1217
      %v1238 = vsel %vm299, %v1234, 0.0
      %v1239 = vsel %vm299, %v1235, 0.0
      %v1240 = vadd.f32 %v1238, %v1239
      %v1241 = vsel %vm299, %v1236, 0.0
      %v1242 = vadd.f32 %v1240, %v1241
      %v1243 = vsel %vm299, %v1237, 0.0
      %v1244 = vadd.f32 %v1242, %v1243
      %1245 = vadd.xlane.f32.xlu0 %v1244
      %v1246 = vpop.xlane.xlu0 %1245
      %v1247 = vrot.slane %v1246, 4
      %v1248 = vadd.f32 %v1246, %v1247
      %v1249 = vrot.slane %v1248, 2
      %v1250 = vadd.f32 %v1248, %v1249
      %v1251 = vrot.slane %v1250, 1
      %v1252 = vadd.f32 %v1250, %v1251
      %s1253 = vtos %v1252
      %v1254 = vmul.f32 %v1214, %v883
      %v1255 = vmul.f32 %v1215, %v886
      %v1256 = vmul.f32 %v1216, %v889
      %v1257 = vmul.f32 %v1217, %v892
      %v1258 = vsel %vm299, %v1254, 0.0
      %v1259 = vsel %vm299, %v1255, 0.0
      %v1260 = vadd.f32 %v1258, %v1259
      %v1261 = vsel %vm299, %v1256, 0.0
      %v1262 = vadd.f32 %v1260, %v1261
      %v1263 = vsel %vm299, %v1257, 0.0
      %v1264 = vadd.f32 %v1262, %v1263
      %1265 = vadd.xlane.f32.xlu0 %v1264
      %v1266 = vpop.xlane.xlu0 %1265
      %v1267 = vrot.slane %v1266, 4
      %v1268 = vadd.f32 %v1266, %v1267
      %v1269 = vrot.slane %v1268, 2
      %v1270 = vadd.f32 %v1268, %v1269
      %v1271 = vrot.slane %v1270, 1
      %v1272 = vadd.f32 %v1270, %v1271
      %s1273 = vtos %v1272
      %s1274 = smul.f32 %s1233, 256.0
      %s1275 = sadd.f32 %s908, %s1274
      %s1276 = smul.f32 %s1273, 2.0
      %s1277 = sadd.f32 %s932, %s1276
      %s1278 = smul.f32 %s1253, 256.0
      %s1279 = sadd.f32 %s1277, %s1278
      %v1280 = vrcp.pop 8192.0
      %s1281 = vtos %v1280
      %s1282 = smul.f32 %s1275, %s1281
      %v1283 = vrcp.pop 8192.0
      %s1284 = vtos %v1283
      %s1285 = smul.f32 %s1279, %s1284
      %s1286 = smul.f32 %s1282, %s1282
      %s1287 = ssub.f32 %s1285, %s1286
      %s1288 = sadd.f32 %s1287, 1e-05
      %v1289 = vstv %s1288
      %v1290 = vrsqrt.pop %v1289
      %s1291 = vtos %v1290
      %1293 = vset.pattern.permute.xlu0 0
      %1294 = vperm.xlu0 %1293, %v1214
      %v1295 = vpop.permute.xlu0 %1294
      %1298 = vset.pattern.permute.xlu0 0
      %1299 = vperm.xlu0 %1298, %v1215
      %v1300 = vpop.permute.xlu0 %1299
      %1303 = vset.pattern.permute.xlu0 0
      %1304 = vperm.xlu0 %1303, %v1216
      %v1305 = vpop.permute.xlu0 %1304
      %1308 = vset.pattern.permute.xlu0 0
      %1309 = vperm.xlu0 %1308, %v1217
      %v1310 = vpop.permute.xlu0 %1309
      %v1312 = vadd.f32 %v873, %v1295
      %v1313 = vadd.f32 %v874, %v1295
      %v1314 = vadd.f32 %v875, %v1300
      %v1315 = vadd.f32 %v876, %v1300
      %v1316 = vadd.f32 %v877, %v1305
      %v1317 = vadd.f32 %v878, %v1305
      %v1318 = vadd.f32 %v879, %v1310
      %v1319 = vadd.f32 %v880, %v1310
      %v1320 = vstv %s1282
      %v1321 = vsub.f32 %v1312, %v1320
      %v1322 = vsub.f32 %v1313, %v1320
      %v1323 = vsub.f32 %v1314, %v1320
      %v1324 = vsub.f32 %v1315, %v1320
      %v1325 = vsub.f32 %v1316, %v1320
      %v1326 = vsub.f32 %v1317, %v1320
      %v1327 = vsub.f32 %v1318, %v1320
      %v1328 = vsub.f32 %v1319, %v1320
      %v1329 = vstv %s1291
      %v1330 = vmul.f32 %v1321, %v1329
      %v1331 = vmul.f32 %v1322, %v1329
      %v1332 = vmul.f32 %v1323, %v1329
      %v1333 = vmul.f32 %v1324, %v1329
      %v1334 = vmul.f32 %v1325, %v1329
      %v1335 = vmul.f32 %v1326, %v1329
      %v1336 = vmul.f32 %v1327, %v1329
      %v1337 = vmul.f32 %v1328, %v1329
      %s1338 = scalar_lea.vmem %s5, 32
      %v1339 = vld [vmem:[%s1338] sm:$0xff]
      %v1340 = vld [vmem:[%s1338 + $0x8] sm:$0xff]
      %v1341 = vld [vmem:[%s1338 + $0x10] sm:$0xff]
      %v1342 = vld [vmem:[%s1338 + $0x18] sm:$0xff]
      %s1343 = scalar_lea.vmem %s4, 64
      %v1344 = vld [vmem:[%s1343] sm:$0xff]
      %v1345 = vld [vmem:[%s1343 + $0x8] sm:$0xff]
      %v1346 = vld [vmem:[%s1343 + $0x10] sm:$0xff]
      %v1347 = vld [vmem:[%s1343 + $0x18] sm:$0xff]
      %v1348 = vld [vmem:[%s1343 + $0x20] sm:$0xff]
      %v1349 = vld [vmem:[%s1343 + $0x28] sm:$0xff]
      %v1350 = vld [vmem:[%s1343 + $0x30] sm:$0xff]
      %v1351 = vld [vmem:[%s1343 + $0x38] sm:$0xff]
      %v1352 = vmul.f32 %v1330, %v1344
      %v1353 = vmul.f32 %v1331, %v1345
      %v1354 = vmul.f32 %v1332, %v1346
      %v1355 = vmul.f32 %v1333, %v1347
      %v1356 = vmul.f32 %v1334, %v1348
      %v1357 = vmul.f32 %v1335, %v1349
      %v1358 = vmul.f32 %v1336, %v1350
      %v1359 = vmul.f32 %v1337, %v1351
      %s1360 = scalar_lea.vmem %s6, 64
      %v1361 = vld [vmem:[%s1360] sm:$0xff]
      %v1362 = vld [vmem:[%s1360 + $0x8] sm:$0xff]
      %v1363 = vld [vmem:[%s1360 + $0x10] sm:$0xff]
      %v1364 = vld [vmem:[%s1360 + $0x18] sm:$0xff]
      %v1365 = vld [vmem:[%s1360 + $0x20] sm:$0xff]
      %v1366 = vld [vmem:[%s1360 + $0x28] sm:$0xff]
      %v1367 = vld [vmem:[%s1360 + $0x30] sm:$0xff]
      %v1368 = vld [vmem:[%s1360 + $0x38] sm:$0xff]
      %v1370 = vsel %vm348, %v1339, 0
      %v1373 = vsel %vm348, %v1340, 0
      %v1376 = vsel %vm348, %v1341, 0
      %v1379 = vsel %vm348, %v1342, 0
      %1381 = vmatprep.subr.mxu0 %v1353
      %1382 = vmatpush1.msra.mxu0 %v1352
      %1383 = vmatprep.subr.mxu0 %v1355
      %1384 = vmatpush1.msra.mxu0 %v1354
      %1385 = vmatprep.subr.mxu0 %v1357
      %1386 = vmatpush1.msra.mxu0 %v1356
      %1387 = vmatprep.subr.mxu0 %v1359
      %1388 = vmatpush1.msra.mxu0 %v1358
      %1389 = vmatprep.subr.mxu0 0.0
      %1390 = vmatpush1.msra.mxu0 0.0
      %1391 = vmatprep.subr.mxu0 0.0
      %1392 = vmatpush1.msra.mxu0 0.0
      %1393 = vmatprep.subr.mxu0 0.0
      %1394 = vmatpush1.msra.mxu0 0.0
      %1395 = vmatprep.subr.mxu0 0.0
      %1396 = vmatpush1.msra.mxu0 0.0
      %1397 = vmatprep.subr.mxu0 0.0
      %1398 = vmatpush1.msra.mxu0 0.0
      %1399 = vmatprep.subr.mxu0 0.0
      %1400 = vmatpush1.msra.mxu0 0.0
      %1401 = vmatprep.subr.mxu0 0.0
      %1402 = vmatpush1.msra.mxu0 0.0
      %1403 = vmatprep.subr.mxu0 0.0
      %1404 = vmatpush1.msra.mxu0 0.0
      %1405 = vmatprep.subr.mxu0 0.0
      %1406 = vmatpush1.msra.mxu0 0.0
      %1407 = vmatprep.subr.mxu0 0.0
      %1408 = vmatpush1.msra.mxu0 0.0
      %1409 = vmatprep.subr.mxu0 0.0
      %1410 = vmatpush1.msra.mxu0 0.0
      %1411 = vmatprep.subr.mxu0 0.0
      %1412 = vmatpush1.msra.mxu0 0.0
      %1413 = vmatprep.subr.mxu0 0.0
      %1414 = vmatpush1.msra.mxu0 0.0
      %1415 = vmatprep.subr.mxu0 0.0
      %1416 = vmatpush1.msra.mxu0 0.0
      %1417 = vmatprep.subr.mxu0 0.0
      %1418 = vmatpush1.msra.mxu0 0.0
      %1419 = vmatprep.subr.mxu0 0.0
      %1420 = vmatpush1.msra.mxu0 0.0
      %1421 = vmatprep.subr.mxu0 0.0
      %1422 = vmatpush1.msra.mxu0 0.0
      %1423 = vmatprep.subr.mxu0 0.0
      %1424 = vmatpush1.msra.mxu0 0.0
      %1425 = vmatprep.subr.mxu0 0.0
      %1426 = vmatpush1.msra.mxu0 0.0
      %1427 = vmatprep.subr.mxu0 0.0
      %1428 = vmatpush1.msra.mxu0 0.0
      %1429 = vmatprep.subr.mxu0 0.0
      %1430 = vmatpush1.msra.mxu0 0.0
      %1431 = vmatprep.subr.mxu0 0.0
      %1432 = vmatpush1.msra.mxu0 0.0
      %1433 = vmatprep.subr.mxu0 0.0
      %1434 = vmatpush1.msra.mxu0 0.0
      %1435 = vmatprep.subr.mxu0 0.0
      %1436 = vmatpush1.msra.mxu0 0.0
      %1437 = vmatprep.subr.mxu0 0.0
      %1438 = vmatpush1.msra.mxu0 0.0
      %1439 = vmatprep.subr.mxu0 0.0
      %1440 = vmatpush1.msra.mxu0 0.0
      %1441 = vmatprep.subr.mxu0 0.0
      %1442 = vmatpush1.msra.mxu0 0.0
      %1443 = vmatprep.subr.mxu0 0.0
      %1444 = vmatpush1.msra.mxu0 0.0
      %1445 = vmatprep.mubr.f32.mxu0 0.0
      %1446 = vmatmul.mubr.f32.gmra.mrb[0].mxu0 %v1370
      %v1447 = vpop.f32.mrb[0].mxu0
      %v1448 = vadd.f32 %v1361, %v1447
      %v1449 = vpop.f32.mrb[0].mxu0
      %v1450 = vadd.f32 %v1362, %v1449
      %1451 = vmatprep.mubr.f32.mxu0 0.0
      %1452 = vmatmul.mubr.f32.gmra.mrb[0].mxu0 %v1373
      %v1453 = vpop.f32.mrb[0].mxu0
      %v1454 = vadd.f32 %v1363, %v1453
      %v1455 = vpop.f32.mrb[0].mxu0
      %v1456 = vadd.f32 %v1364, %v1455
      %1457 = vmatprep.mubr.f32.mxu0 0.0
      %1458 = vmatmul.mubr.f32.gmra.mrb[0].mxu0 %v1376
      %v1459 = vpop.f32.mrb[0].mxu0
      %v1460 = vadd.f32 %v1365, %v1459
      %v1461 = vpop.f32.mrb[0].mxu0
      %v1462 = vadd.f32 %v1366, %v1461
      %1463 = vmatprep.mubr.f32.mxu0 0.0
      %1464 = vmatmul.mubr.f32.gmra.mrb[0].mxu0 %v1379
      %v1465 = vpop.f32.mrb[0].mxu0
      %v1466 = vadd.f32 %v1367, %v1465
      %v1467 = vpop.f32.mrb[0].mxu0
      %v1468 = vadd.f32 %v1368, %v1467
      %1469 = vdwg.mxu0
      %v1470 = vmax.f32 %v1448, 0.0
      %v1471 = vmax.f32 %v1450, 0.0
      %v1472 = vmax.f32 %v1454, 0.0
      %v1473 = vmax.f32 %v1456, 0.0
      %v1474 = vmax.f32 %v1460, 0.0
      %v1475 = vmax.f32 %v1462, 0.0
      %v1476 = vmax.f32 %v1466, 0.0
      %v1477 = vmax.f32 %v1468, 0.0
      %1478 = vst [vmem:[%s278] sm:$0xff] %v1470
      %1479 = vst [vmem:[%s278 + $0x8] sm:$0xff] %v1471
      %1480 = vst [vmem:[%s278 + $0x10] sm:$0xff] %v1472
      %1481 = vst [vmem:[%s278 + $0x18] sm:$0xff] %v1473
      %1482 = vst [vmem:[%s278 + $0x20] sm:$0xff] %v1474
      %1483 = vst [vmem:[%s278 + $0x28] sm:$0xff] %v1475
      %1484 = vst [vmem:[%s278 + $0x30] sm:$0xff] %v1476
      %1485 = vst [vmem:[%s278 + $0x38] sm:$0xff] %v1477
      %p1486 = scmp.lt.s32.totalorder %s18, 1
      %s1487 = scalar_select %p1486, %s18, 1
      %s1488 = smul.addr %s1487, 8
      %s1489 = smul.addr %s1488, 8
      %s1490 = scalar_lea.vmem %s7, %s1489
      // Predicated region
      $region49: #{multi_layer_cross_attention.1} parent=47 // pred_check
        %p1491 = pneg %p188
      $region50: #{multi_layer_cross_attention.1} parent=47 // pred_check_branch
        %1493 = sbr.rel (%p1491) target = $region52
      $region51: #{multi_layer_cross_attention.1} parent=47 // pred_region
        _
      $region52: #{multi_layer_cross_attention.1} parent=47 // pred_fallthru
        _
    $region48: #{multi_layer_cross_attention.1} parent=5 // pred_fallthru
      _
    %p1494 = scmp.le.s32.totalorder 2, %s13
    // Predicated region
    $region53: #{multi_layer_cross_attention.1} parent=5 // pred_check
      %p1495 = pneg %p1494
    $region54: #{multi_layer_cross_attention.1} parent=5 // pred_check_branch
      %1497 = sbr.rel (%p1495) target = $region56
    $region55: #{multi_layer_cross_attention.1} parent=5 // pred_region
      %s1498 = ssub.s32 %s13, 2
      // Predicated region
      $region57: #{multi_layer_cross_attention.1} parent=55 // pred_check
        %p1499 = pneg %p194
      $region58: #{multi_layer_cross_attention.1} parent=55 // pred_check_branch
        %1501 = sbr.rel (%p1499) target = $region60
      $region59: #{multi_layer_cross_attention.1} parent=55 // pred_region
        %p1502 = scmp.lt.s32.totalorder %s19, 1
        %s1503 = scalar_select %p1502, %s19, 1
        %s1504 = smul.addr %s1503, 8
        %s1505 = smul.addr %s1504, 8
        %s1506 = scalar_lea.vmem %s7, %s1505
      $region60: #{multi_layer_cross_attention.1} parent=55 // pred_fallthru
        _
    $region56: #{multi_layer_cross_attention.1} parent=5 // pred_fallthru
      _
  $region6: #{multi_layer_cross_attention.1} parent=0 // loop_footer
    %s17 = sadd.s32 1, %s13
  $region7: #{multi_layer_cross_attention.1} parent=0 // loop_footer_branch
    %12 = sbr.rel target = $region3
  $region8: #{multi_layer_cross_attention.1} parent=0 // loop_exit
    _

</llo_original>
